<compile_context>
chip_gen: v6e
topology: v6e:2x2x1
jax: 0.10.0
libtpu: 0.0.40
codegen_flags: <defaults>
</compile_context>

<pallas_src>
import math

import jax
import jax.numpy as jnp
import numpy as np
from jax.experimental import pallas as pl
from jax.experimental.pallas import tpu as pltpu


# ---------------------------------------------------------------------------
# Generation-aware sizing helpers
# ---------------------------------------------------------------------------
def _tpu_vmem_capacity_bytes() -> int:
    """Physical VMEM per TensorCore; conservative fallbacks if query fails."""
    try:
        info = pltpu.get_tpu_info()
        cap = int(getattr(info, "vmem_capacity_bytes", 0))
        if cap > 0:
            return cap
    except Exception:
        pass
    try:
        kind = jax.devices()[0].device_kind.lower()
        if "v7" in kind:
            return 64 * 1024 * 1024
    except Exception:
        pass
    return 128 * 1024 * 1024


def _num_tensorcores() -> int:
    """TensorCores per chip (v7x has 2; v5e/v6e have 1)."""
    try:
        kind = jax.devices()[0].device_kind.lower()
        if "v7" in kind:
            return 2
    except Exception:
        pass
    return 1


def _vmem_estimate_bytes(bt, seq, chans, n_heads, d_k, cd_bytes):
    """Rough live-set estimate for one grid step with batch block `bt`."""
    m = bt * seq
    hk = n_heads * d_k
    io_blocks = 2 * 2 * m * chans * 4            # double-buffered f32 x & out blocks
    qkv_live = m * 3 * hk * (4 + cd_bytes)       # fused f32 QKV + per-head casts
    scores_live = 3 * bt * seq * seq * 4         # s, exp temp, p (f32) co-live
    res_scratch = m * hk * cd_bytes              # staged per-head results
    weights = (chans * 3 * hk + hk * chans) * cd_bytes * 2
    return io_blocks + qkv_live + scores_live + res_scratch + weights + (2 << 20)


def _pick_batch_block(batch, seq, chans, n_heads, d_k, cd_bytes,
                      vmem_budget_bytes, min_grid_steps):
    """Largest divisor of `batch` whose live set fits and keeps >= min steps."""
    best = 1
    for cand in range(1, batch + 1):
        if batch % cand:
            continue
        if (batch // cand) < min(min_grid_steps, batch):
            continue
        if _vmem_estimate_bytes(cand, seq, chans, n_heads, d_k,
                                cd_bytes) <= vmem_budget_bytes:
            best = cand
    return best


# ---------------------------------------------------------------------------
# Kernel
# ---------------------------------------------------------------------------
def _attention_kernel(n_heads, d_k, compute_dtype):
    """Per-batch-block attention kernel (all heads handled in-kernel)."""

    def kernel(x_ref, wqkv_ref, bqkv_ref, wo_ref, bo_ref, o_ref, res_sc):
        # x_ref    : (Bt, S, C)        f32
        # wqkv_ref : (C, 3*H*dk)       compute_dtype  (Q cols pre-scaled)
        # bqkv_ref : (1, 3*H*dk)       f32            (Q part pre-scaled)
        # wo_ref   : (H*dk, C)         compute_dtype
        # bo_ref   : (1, 1, C)         f32
        # o_ref    : (Bt, S, C)        f32
        # res_sc   : (Bt*S, H*dk)      compute_dtype  VMEM scratch
        Bt, S, C = x_ref.shape
        H, dk = n_heads, d_k

        x = x_ref[...]                                        # (Bt, S, C) f32
        # Single cast, batch folded into the matmul M dimension.
        x2 = x.reshape(Bt * S, C).astype(compute_dtype)       # (Bt*S, C)

        # Fused QKV projection for ALL heads: N = 3*H*dk on the MXU.
        qkv = jnp.dot(x2, wqkv_ref[...],
                      preferred_element_type=jnp.float32) + bqkv_ref[...]
        # Column layout: [Q head0..H-1 | K head0..H-1 | V head0..H-1].

        # Per-head attention core (static unroll; H is small in U-Net blocks).
        for h in range(H):
            q = qkv[:, h * dk:(h + 1) * dk]
            k = qkv[:, (H + h) * dk:(H + h + 1) * dk]
            v = qkv[:, (2 * H + h) * dk:(2 * H + h + 1) * dk]

            q3 = q.reshape(Bt, S, dk).astype(compute_dtype)
            k3 = k.reshape(Bt, S, dk).astype(compute_dtype)
            v3 = v.reshape(Bt, S, dk).astype(compute_dtype)

            s = jnp.einsum('bqd,bkd->bqk', q3, k3,
                           preferred_element_type=jnp.float32)    # (Bt, S, S)
            m = jnp.max(s, axis=-1, keepdims=True)
            p = jnp.exp(s - m)
            denom = jnp.sum(p, axis=-1, keepdims=True)
            p = p * pl.reciprocal(denom, approx=True)

            r = jnp.einsum('bqk,bkd->bqd', p.astype(compute_dtype), v3,
                           preferred_element_type=jnp.float32)    # (Bt, S, dk)
            res_sc[:, h * dk:(h + 1) * dk] = (
                r.reshape(Bt * S, dk).astype(compute_dtype))

        # Single fused output projection across all heads + bias + residual.
        proj = jnp.dot(res_sc[...], wo_ref[...],
                       preferred_element_type=jnp.float32)        # (Bt*S, C)
        o_ref[...] = x + proj.reshape(Bt, S, C) + bo_ref[...]

    return kernel


# ---------------------------------------------------------------------------
# Wrapper
# ---------------------------------------------------------------------------
def attention_block(x_nchw, wp, bp, wo, bo, *, n_heads: int, d_k: int,
                    compute_dtype=jnp.bfloat16, batch_block=None):
    """Forward pass of AttentionBlock.

    x_nchw: [B, C, H, W] float32
    wp:     [C, n_heads*3*d_k]   (pre-transposed projection weight)
    bp:     [n_heads*3*d_k]
    wo:     [n_heads*d_k, C]     (pre-transposed output weight)
    bo:     [C]
    """
    B, C, H, W = x_nchw.shape
    S = H * W
    HK = n_heads * d_k
    scale = d_k ** (-0.5)
    cd_bytes = jnp.dtype(compute_dtype).itemsize

    # Glue: NCHW -> [B, S, C].
    x_seq = jnp.transpose(x_nchw.reshape(B, C, S), (0, 2, 1)).astype(jnp.float32)

    # --- weight preprocessing: fused [Q|K|V] layout, scale folded into Q -----
    # PyTorch layout: column f of wp -> head f // (3*dk), part (f % 3dk) // dk.
    wp_r = wp.reshape(C, n_heads, 3, d_k)
    wq = (wp_r[:, :, 0, :] * scale).reshape(C, HK)
    wk = wp_r[:, :, 1, :].reshape(C, HK)
    wv = wp_r[:, :, 2, :].reshape(C, HK)
    wqkv = jnp.concatenate([wq, wk, wv], axis=1).astype(compute_dtype)  # [C, 3*HK]

    bp_r = bp.reshape(n_heads, 3, d_k)
    bq = (bp_r[:, 0, :] * scale).reshape(1, HK)
    bk = bp_r[:, 1, :].reshape(1, HK)
    bv = bp_r[:, 2, :].reshape(1, HK)
    bqkv = jnp.concatenate([bq, bk, bv], axis=1).astype(jnp.float32)    # [1, 3*HK]

    wo_m = wo.astype(compute_dtype)                                     # [HK, C]
    bo3 = bo.reshape(1, 1, C).astype(jnp.float32)

    # --- generation-aware sizing --------------------------------------------
    vmem_cap = _tpu_vmem_capacity_bytes()
    n_cores = _num_tensorcores()
    if vmem_cap <= 64 * 1024 * 1024:       # v7x-class part
        vmem_limit = 40 * 1024 * 1024
    else:                                  # v5e / v6e (128 MiB)
        vmem_limit = 64 * 1024 * 1024

    if batch_block is None:
        batch_block = _pick_batch_block(
            B, S, C, n_heads, d_k, cd_bytes,
            vmem_budget_bytes=int(vmem_limit * 0.9),
            min_grid_steps=n_cores)
    Bt = batch_block
    assert B % Bt == 0, "batch_block must divide the batch size"

    kernel = _attention_kernel(n_heads, d_k, compute_dtype)

    out_seq = pl.pallas_call(
        kernel,
        out_shape=jax.ShapeDtypeStruct((B, S, C), jnp.float32),
        grid_spec=pltpu.PrefetchScalarGridSpec(
            num_scalar_prefetch=0,
            grid=(B // Bt,),                 # single (parallel) batch-block axis
            in_specs=[
                pl.BlockSpec((Bt, S, C), lambda b: (b, 0, 0)),      # x
                pl.BlockSpec((C, 3 * HK), lambda b: (0, 0)),        # fused QKV W
                pl.BlockSpec((1, 3 * HK), lambda b: (0, 0)),        # fused QKV b
                pl.BlockSpec((HK, C), lambda b: (0, 0)),            # output W
                pl.BlockSpec((1, 1, C), lambda b: (0, 0, 0)),       # output b
            ],
            out_specs=pl.BlockSpec((Bt, S, C), lambda b: (b, 0, 0)),
            scratch_shapes=[pltpu.VMEM((Bt * S, HK), compute_dtype)],
        ),
        compiler_params=pltpu.CompilerParams(
            dimension_semantics=("parallel",),
            vmem_limit_bytes=vmem_limit),
    )(x_seq, wqkv, bqkv, wo_m, bo3)

    # Glue: [B, S, C] -> NCHW.
    return jnp.transpose(out_seq, (0, 2, 1)).reshape(B, C, H, W)


# ---------------------------------------------------------------------------
# Pure-JAX reference + test harness
# ---------------------------------------------------------------------------
def _reference(x_nchw, wp, bp, wo, bo, *, n_heads, d_k):
    """Pure-JAX f32 reference mirroring the PyTorch forward."""
    B, C, H, W = x_nchw.shape
    scale = d_k ** (-0.5)
    x = jnp.transpose(x_nchw.reshape(B, C, -1), (0, 2, 1))          # [B,S,C]
    qkv = (x @ wp + bp).reshape(B, -1, n_heads, 3 * d_k)
    q, k, v = jnp.split(qkv, 3, axis=-1)
    attn = jnp.einsum('bihd,bjhd->bijh', q, k) * scale
    attn = jax.nn.softmax(attn, axis=2)
    res = jnp.einsum('bijh,bjhd->bihd', attn, v)
    res = res.reshape(B, -1, n_heads * d_k)
    res = res @ wo + bo
    res = res + x
    return jnp.transpose(res, (0, 2, 1)).reshape(B, C, H, W)


def _make_params(key, C, n_heads, d_k):
    kwp, kbp, kwo, kbo = jax.random.split(key, 4)
    proj_out = n_heads * d_k * 3
    bound_p = 1.0 / math.sqrt(C)
    wp = jax.random.uniform(kwp, (C, proj_out), jnp.float32, -bound_p, bound_p)
    bp = jax.random.uniform(kbp, (proj_out,), jnp.float32, -bound_p, bound_p)
    bound_o = 1.0 / math.sqrt(n_heads * d_k)
    wo = jax.random.uniform(kwo, (n_heads * d_k, C), jnp.float32, -bound_o, bound_o)
    bo = jax.random.uniform(kbo, (C,), jnp.float32, -bound_o, bound_o)
    return wp, bp, wo, bo


if __name__ == "__main__":
    key = jax.random.PRNGKey(0)

    # bf16 matmuls + f32 softmax/residual -> relaxed tolerance vs f32 reference.
    TOL = dict(rtol=2e-2, atol=2e-2)

    # Case 1: two heads, small spatial grid.
    k1, k2, key = jax.random.split(key, 3)
    B, C, H, W = 2, 32, 8, 8
    n_heads, d_k = 2, 16
    x = jax.random.normal(k1, (B, C, H, W), dtype=jnp.float32)
    wp, bp, wo, bo = _make_params(k2, C, n_heads, d_k)
    out = jax.block_until_ready(
        attention_block(x, wp, bp, wo, bo, n_heads=n_heads, d_k=d_k))
    ref = _reference(x, wp, bp, wo, bo, n_heads=n_heads, d_k=d_k)
    np.testing.assert_allclose(np.asarray(out), np.asarray(ref), **TOL)

    # Case 2: single head (module default), d_k == n_channels, larger batch.
    k1, k2, key = jax.random.split(key, 3)
    B, C, H, W = 4, 32, 4, 4
    n_heads, d_k = 1, 32
    x = jax.random.normal(k1, (B, C, H, W), dtype=jnp.float32)
    wp, bp, wo, bo = _make_params(k2, C, n_heads, d_k)
    out = jax.block_until_ready(
        attention_block(x, wp, bp, wo, bo, n_heads=n_heads, d_k=d_k))
    ref = _reference(x, wp, bp, wo, bo, n_heads=n_heads, d_k=d_k)
    np.testing.assert_allclose(np.asarray(out), np.asarray(ref), **TOL)

    print("KERNEL_OK")
</pallas_src>

<mosaic_0001>
module attributes {stable_mosaic.version = 11 : i64} {
  func.func @kernel(%arg0: i32, %arg1: memref<2x64x32xf32, #tpu.memory_space<vmem>>, %arg2: memref<32x96xbf16, #tpu.memory_space<vmem>>, %arg3: memref<1x96xf32, #tpu.memory_space<vmem>>, %arg4: memref<32x32xbf16, #tpu.memory_space<vmem>>, %arg5: memref<1x1x32xf32, #tpu.memory_space<vmem>>, %arg6: memref<2x64x32xf32, #tpu.memory_space<vmem>>, %arg7: memref<128x32xbf16, #tpu.memory_space<vmem>>) attributes {dimension_semantics = [#tpu.dimension_semantics<parallel>], iteration_bounds = array<i64: 1>, scalar_prefetch = 0 : i64, scratch_operands = 1 : i64, tpu.core_type = #tpu.core_type<tc>, window_params = [{transform_indices = @transform_0, window_bounds = array<i64: 2, 64, 32>}, {pipeline_mode = #tpu.pipeline_mode<synchronous>, transform_indices = @transform_1, window_bounds = array<i64: 32, 96>}, {pipeline_mode = #tpu.pipeline_mode<synchronous>, transform_indices = @transform_2, window_bounds = array<i64: 1, 96>}, {pipeline_mode = #tpu.pipeline_mode<synchronous>, transform_indices = @transform_3, window_bounds = array<i64: 32, 32>}, {pipeline_mode = #tpu.pipeline_mode<synchronous>, transform_indices = @transform_4, window_bounds = array<i64: 1, 1, 32>}, {transform_indices = @transform_5, window_bounds = array<i64: 2, 64, 32>}]} {
    %c0 = arith.constant 0 : index
    %c0_0 = arith.constant 0 : index
    %c0_1 = arith.constant 0 : index
    %0 = vector.load %arg1[%c0, %c0_0, %c0_1] : memref<2x64x32xf32, #tpu.memory_space<vmem>>, vector<2x64x32xf32>
    %1 = vector.shape_cast %0 : vector<2x64x32xf32> to vector<128x32xf32>
    %2 = arith.truncf %1 : vector<128x32xf32> to vector<128x32xbf16>
    %c0_2 = arith.constant 0 : index
    %c0_3 = arith.constant 0 : index
    %3 = vector.load %arg2[%c0_2, %c0_3] : memref<32x96xbf16, #tpu.memory_space<vmem>>, vector<32x96xbf16>
    %cst = arith.constant dense<0.000000e+00> : vector<128x96xf32>
    %4 = tpu.matmul %2, %3, %cst {dimension_numbers = #tpu.dot_dimension_numbers<[1], [0], [0], [1], [0, 0, 1, 1], [], []>} : vector<128x32xbf16>, vector<32x96xbf16>, vector<128x96xf32> -> vector<128x96xf32>
    %c0_4 = arith.constant 0 : index
    %c0_5 = arith.constant 0 : index
    %5 = vector.load %arg3[%c0_4, %c0_5] : memref<1x96xf32, #tpu.memory_space<vmem>>, vector<1x96xf32>
    %6 = vector.broadcast %5 : vector<1x96xf32> to vector<128x96xf32>
    %7 = arith.addf %4, %6 : vector<128x96xf32>
    %8 = vector.extract_strided_slice %7 {offsets = [0, 0], sizes = [128, 16], strides = [1, 1]} : vector<128x96xf32> to vector<128x16xf32>
    %9 = vector.extract_strided_slice %7 {offsets = [0, 32], sizes = [128, 16], strides = [1, 1]} : vector<128x96xf32> to vector<128x16xf32>
    %10 = vector.extract_strided_slice %7 {offsets = [0, 64], sizes = [128, 16], strides = [1, 1]} : vector<128x96xf32> to vector<128x16xf32>
    %11 = vector.shape_cast %8 : vector<128x16xf32> to vector<2x64x16xf32>
    %12 = arith.truncf %11 : vector<2x64x16xf32> to vector<2x64x16xbf16>
    %13 = vector.shape_cast %9 : vector<128x16xf32> to vector<2x64x16xf32>
    %14 = arith.truncf %13 : vector<2x64x16xf32> to vector<2x64x16xbf16>
    %15 = vector.shape_cast %10 : vector<128x16xf32> to vector<2x64x16xf32>
    %16 = arith.truncf %15 : vector<2x64x16xf32> to vector<2x64x16xbf16>
    "tpu.trace_start"() <{level = 10 : i32, message = "bqd,bkd->bqk"}> : () -> ()
    %cst_6 = arith.constant dense<0.000000e+00> : vector<2x64x64xf32>
    %17 = tpu.matmul %12, %14, %cst_6 {dimension_numbers = #tpu.dot_dimension_numbers<[2], [2], [1], [1], [0, 0, 0, 1, 1, 1], [0], [0]>} : vector<2x64x16xbf16>, vector<2x64x16xbf16>, vector<2x64x64xf32> -> vector<2x64x64xf32>
    "tpu.trace_stop"() : () -> ()
    %cst_7 = arith.constant dense<0xFF800000> : vector<2x64xf32>
    %18 = vector.multi_reduction <maximumf>, %17, %cst_7 [2] : vector<2x64x64xf32> to vector<2x64xf32>
    %19 = vector.shape_cast %18 : vector<2x64xf32> to vector<2x64x1xf32>
    %20 = vector.broadcast %19 : vector<2x64x1xf32> to vector<2x64x64xf32>
    %21 = arith.subf %17, %20 : vector<2x64x64xf32>
    %22 = math.exp %21 : vector<2x64x64xf32>
    %cst_8 = arith.constant dense<0.000000e+00> : vector<2x64xf32>
    %23 = vector.multi_reduction <add>, %22, %cst_8 [2] : vector<2x64x64xf32> to vector<2x64xf32>
    %24 = vector.shape_cast %23 : vector<2x64xf32> to vector<2x64x1xf32>
    %25 = tpu.reciprocal %24 {approx = true} : vector<2x64x1xf32> -> vector<2x64x1xf32>
    %26 = vector.broadcast %25 : vector<2x64x1xf32> to vector<2x64x64xf32>
    %27 = arith.mulf %22, %26 : vector<2x64x64xf32>
    %28 = arith.truncf %27 : vector<2x64x64xf32> to vector<2x64x64xbf16>
    "tpu.trace_start"() <{level = 10 : i32, message = "bqk,bkd->bqd"}> : () -> ()
    %cst_9 = arith.constant dense<0.000000e+00> : vector<2x64x16xf32>
    %29 = tpu.matmul %28, %16, %cst_9 {dimension_numbers = #tpu.dot_dimension_numbers<[2], [1], [1], [2], [0, 0, 0, 1, 1, 2], [0], [0]>} : vector<2x64x64xbf16>, vector<2x64x16xbf16>, vector<2x64x16xf32> -> vector<2x64x16xf32>
    "tpu.trace_stop"() : () -> ()
    %30 = vector.shape_cast %29 : vector<2x64x16xf32> to vector<128x16xf32>
    %31 = arith.truncf %30 : vector<128x16xf32> to vector<128x16xbf16>
    %c0_10 = arith.constant 0 : index
    %c0_11 = arith.constant 0 : index
    %32 = vector.load %arg7[%c0_10, %c0_11] : memref<128x32xbf16, #tpu.memory_space<vmem>>, vector<128x16xbf16>
    tpu.vector_store %arg7[%c0_10, %c0_11], %31 {strides = array<i32>} : memref<128x32xbf16, #tpu.memory_space<vmem>>, vector<128x16xbf16>,
    %33 = vector.extract_strided_slice %7 {offsets = [0, 16], sizes = [128, 16], strides = [1, 1]} : vector<128x96xf32> to vector<128x16xf32>
    %34 = vector.extract_strided_slice %7 {offsets = [0, 48], sizes = [128, 16], strides = [1, 1]} : vector<128x96xf32> to vector<128x16xf32>
    %35 = vector.extract_strided_slice %7 {offsets = [0, 80], sizes = [128, 16], strides = [1, 1]} : vector<128x96xf32> to vector<128x16xf32>
    %36 = vector.shape_cast %33 : vector<128x16xf32> to vector<2x64x16xf32>
    %37 = arith.truncf %36 : vector<2x64x16xf32> to vector<2x64x16xbf16>
    %38 = vector.shape_cast %34 : vector<128x16xf32> to vector<2x64x16xf32>
    %39 = arith.truncf %38 : vector<2x64x16xf32> to vector<2x64x16xbf16>
    %40 = vector.shape_cast %35 : vector<128x16xf32> to vector<2x64x16xf32>
    %41 = arith.truncf %40 : vector<2x64x16xf32> to vector<2x64x16xbf16>
    "tpu.trace_start"() <{level = 10 : i32, message = "bqd,bkd->bqk"}> : () -> ()
    %cst_12 = arith.constant dense<0.000000e+00> : vector<2x64x64xf32>
    %42 = tpu.matmul %37, %39, %cst_12 {dimension_numbers = #tpu.dot_dimension_numbers<[2], [2], [1], [1], [0, 0, 0, 1, 1, 1], [0], [0]>} : vector<2x64x16xbf16>, vector<2x64x16xbf16>, vector<2x64x64xf32> -> vector<2x64x64xf32>
    "tpu.trace_stop"() : () -> ()
    %cst_13 = arith.constant dense<0xFF800000> : vector<2x64xf32>
    %43 = vector.multi_reduction <maximumf>, %42, %cst_13 [2] : vector<2x64x64xf32> to vector<2x64xf32>
    %44 = vector.shape_cast %43 : vector<2x64xf32> to vector<2x64x1xf32>
    %45 = vector.broadcast %44 : vector<2x64x1xf32> to vector<2x64x64xf32>
    %46 = arith.subf %42, %45 : vector<2x64x64xf32>
    %47 = math.exp %46 : vector<2x64x64xf32>
    %cst_14 = arith.constant dense<0.000000e+00> : vector<2x64xf32>
    %48 = vector.multi_reduction <add>, %47, %cst_14 [2] : vector<2x64x64xf32> to vector<2x64xf32>
    %49 = vector.shape_cast %48 : vector<2x64xf32> to vector<2x64x1xf32>
    %50 = tpu.reciprocal %49 {approx = true} : vector<2x64x1xf32> -> vector<2x64x1xf32>
    %51 = vector.broadcast %50 : vector<2x64x1xf32> to vector<2x64x64xf32>
    %52 = arith.mulf %47, %51 : vector<2x64x64xf32>
    %53 = arith.truncf %52 : vector<2x64x64xf32> to vector<2x64x64xbf16>
    "tpu.trace_start"() <{level = 10 : i32, message = "bqk,bkd->bqd"}> : () -> ()
    %cst_15 = arith.constant dense<0.000000e+00> : vector<2x64x16xf32>
    %54 = tpu.matmul %53, %41, %cst_15 {dimension_numbers = #tpu.dot_dimension_numbers<[2], [1], [1], [2], [0, 0, 0, 1, 1, 2], [0], [0]>} : vector<2x64x64xbf16>, vector<2x64x16xbf16>, vector<2x64x16xf32> -> vector<2x64x16xf32>
    "tpu.trace_stop"() : () -> ()
    %55 = vector.shape_cast %54 : vector<2x64x16xf32> to vector<128x16xf32>
    %56 = arith.truncf %55 : vector<128x16xf32> to vector<128x16xbf16>
    %c0_16 = arith.constant 0 : index
    %c16 = arith.constant 16 : index
    %57 = vector.load %arg7[%c0_16, %c16] : memref<128x32xbf16, #tpu.memory_space<vmem>>, vector<128x16xbf16>
    tpu.vector_store %arg7[%c0_16, %c16], %56 {strides = array<i32>} : memref<128x32xbf16, #tpu.memory_space<vmem>>, vector<128x16xbf16>,
    %c0_17 = arith.constant 0 : index
    %c0_18 = arith.constant 0 : index
    %58 = vector.load %arg7[%c0_17, %c0_18] : memref<128x32xbf16, #tpu.memory_space<vmem>>, vector<128x32xbf16>
    %c0_19 = arith.constant 0 : index
    %c0_20 = arith.constant 0 : index
    %59 = vector.load %arg4[%c0_19, %c0_20] : memref<32x32xbf16, #tpu.memory_space<vmem>>, vector<32x32xbf16>
    %cst_21 = arith.constant dense<0.000000e+00> : vector<128x32xf32>
    %60 = tpu.matmul %58, %59, %cst_21 {dimension_numbers = #tpu.dot_dimension_numbers<[1], [0], [0], [1], [0, 0, 1, 1], [], []>} : vector<128x32xbf16>, vector<32x32xbf16>, vector<128x32xf32> -> vector<128x32xf32>
    %61 = vector.shape_cast %60 : vector<128x32xf32> to vector<2x64x32xf32>
    %62 = arith.addf %0, %61 : vector<2x64x32xf32>
    %c0_22 = arith.constant 0 : index
    %c0_23 = arith.constant 0 : index
    %c0_24 = arith.constant 0 : index
    %63 = vector.load %arg5[%c0_22, %c0_23, %c0_24] : memref<1x1x32xf32, #tpu.memory_space<vmem>>, vector<1x1x32xf32>
    %64 = vector.broadcast %63 : vector<1x1x32xf32> to vector<2x64x32xf32>
    %65 = arith.addf %62, %64 : vector<2x64x32xf32>
    %c0_25 = arith.constant 0 : index
    %c0_26 = arith.constant 0 : index
    %c0_27 = arith.constant 0 : index
    %66 = vector.load %arg6[%c0_25, %c0_26, %c0_27] : memref<2x64x32xf32, #tpu.memory_space<vmem>>, vector<2x64x32xf32>
    tpu.vector_store %arg6[%c0_25, %c0_26, %c0_27], %65 {strides = array<i32>} : memref<2x64x32xf32, #tpu.memory_space<vmem>>, vector<2x64x32xf32>,
    return
  }
  func.func @transform_0(%arg0: i32) -> (i32, i32, i32) {
    %c0_i32 = arith.constant 0 : i32
    %c0_i32_0 = arith.constant 0 : i32
    %c0_i32_1 = arith.constant 0 : i32
    return %arg0, %c0_i32, %c0_i32_0 : i32, i32, i32
  }
  func.func @transform_1(%arg0: i32) -> (i32, i32) {
    %c0_i32 = arith.constant 0 : i32
    %c0_i32_0 = arith.constant 0 : i32
    %c0_i32_1 = arith.constant 0 : i32
    return %c0_i32, %c0_i32_0 : i32, i32
  }
  func.func @transform_2(%arg0: i32) -> (i32, i32) {
    %c0_i32 = arith.constant 0 : i32
    %c0_i32_0 = arith.constant 0 : i32
    %c0_i32_1 = arith.constant 0 : i32
    return %c0_i32, %c0_i32_0 : i32, i32
  }
  func.func @transform_3(%arg0: i32) -> (i32, i32) {
    %c0_i32 = arith.constant 0 : i32
    %c0_i32_0 = arith.constant 0 : i32
    %c0_i32_1 = arith.constant 0 : i32
    return %c0_i32, %c0_i32_0 : i32, i32
  }
  func.func @transform_4(%arg0: i32) -> (i32, i32, i32) {
    %c0_i32 = arith.constant 0 : i32
    %c0_i32_0 = arith.constant 0 : i32
    %c0_i32_1 = arith.constant 0 : i32
    %c0_i32_2 = arith.constant 0 : i32
    return %c0_i32, %c0_i32_0, %c0_i32_1 : i32, i32, i32
  }
  func.func @transform_5(%arg0: i32) -> (i32, i32, i32) {
    %c0_i32 = arith.constant 0 : i32
    %c0_i32_0 = arith.constant 0 : i32
    %c0_i32_1 = arith.constant 0 : i32
    return %arg0, %c0_i32, %c0_i32_0 : i32, i32, i32
  }
}

</mosaic_0001>

<llo_original>
// kernel: tpu_custom_call.1
$region0: #{tpu_custom_call.1}
  #allocation0 [shape = 'u32[]', space=smem, size = 0x4, offset = 0x4, fixed_abs, tag = 'smem constant byte address 0x4 - core index']
  #allocation1 [shape = 'u32[144,128]{1,0:T(1,128)}', space=vmem, size = 0x12000, scoped, tag = 'internal scratch']
  #allocation2 [shape = 'bf16[128,32]{1,0:T(8,128)(2,1)}', space=vmem, size = 0x8000, scoped, tag = 'scratch operand']
  %s0 = inlined_call_operand.vmem [shape: f32[2,64,32], index: 0, kind: input, shape index: {}]
  %s1 = inlined_call_operand.vmem [shape: bf16[32,96], index: 1, kind: input, shape index: {}]
  %s2 = inlined_call_operand.vmem [shape: f32[1,96], index: 2, kind: input, shape index: {}]
  %s3 = inlined_call_operand.vmem [shape: bf16[32,32], index: 3, kind: input, shape index: {}]
  %s4 = inlined_call_operand.vmem [shape: f32[1,1,32], index: 4, kind: input, shape index: {}]
  %s5 = inlined_call_operand.vmem [shape: f32[2,64,32], index: 5, kind: output, shape index: {}]
  %s6 = sld [smem:[#allocation0]]
  $region30: #{tpu_custom_call.1} parent=0
    _
  %s8 = ssub.s32 1, %s6
  %s9 = scalar_select 0, %s8, %s6
  // Predicated region
  $region2: #{tpu_custom_call.1} parent=0 // pred_check
    _
  $region3: #{tpu_custom_call.1} parent=0 // pred_check_branch
    %11 = sbr.rel (0) target = $region5
  $region4: #{tpu_custom_call.1} parent=0 // pred_region
    _
  $region5: #{tpu_custom_call.1} parent=0 // pred_fallthru
    _
  // Predicated region
  $region6: #{tpu_custom_call.1} parent=0 // pred_check
    _
  $region7: #{tpu_custom_call.1} parent=0 // pred_check_branch
    %13 = sbr.rel (0) target = $region9
  $region8: #{tpu_custom_call.1} parent=0 // pred_region
    _
  $region9: #{tpu_custom_call.1} parent=0 // pred_fallthru
    _
  // Predicated region
  $region10: #{tpu_custom_call.1} parent=0 // pred_check
    _
  $region11: #{tpu_custom_call.1} parent=0 // pred_check_branch
    %15 = sbr.rel (0) target = $region13
  $region12: #{tpu_custom_call.1} parent=0 // pred_region
    _
  $region13: #{tpu_custom_call.1} parent=0 // pred_fallthru
    _
  // Predicated region
  $region14: #{tpu_custom_call.1} parent=0 // pred_check
    _
  $region15: #{tpu_custom_call.1} parent=0 // pred_check_branch
    %17 = sbr.rel (0) target = $region17
  $region16: #{tpu_custom_call.1} parent=0 // pred_region
    _
  $region17: #{tpu_custom_call.1} parent=0 // pred_fallthru
    _
  // Predicated region
  $region18: #{tpu_custom_call.1} parent=0 // pred_check
    _
  $region19: #{tpu_custom_call.1} parent=0 // pred_check_branch
    %19 = sbr.rel (0) target = $region21
  $region20: #{tpu_custom_call.1} parent=0 // pred_region
    _
  $region21: #{tpu_custom_call.1} parent=0 // pred_fallthru
    _
  %v21 = vld [vmem:[%s0] sm:$0xff]
  %v22 = vld [vmem:[%s0 + $0x8] sm:$0xff]
  %v23 = vld [vmem:[%s0 + $0x10] sm:$0xff]
  %v24 = vld [vmem:[%s0 + $0x18] sm:$0xff]
  %v25 = vld [vmem:[%s0 + $0x20] sm:$0xff]
  %v26 = vld [vmem:[%s0 + $0x28] sm:$0xff]
  %v27 = vld [vmem:[%s0 + $0x30] sm:$0xff]
  %v28 = vld [vmem:[%s0 + $0x38] sm:$0xff]
  %v29 = vld [vmem:[%s0 + $0x40] sm:$0xff]
  %v30 = vld [vmem:[%s0 + $0x48] sm:$0xff]
  %v31 = vld [vmem:[%s0 + $0x50] sm:$0xff]
  %v32 = vld [vmem:[%s0 + $0x58] sm:$0xff]
  %v33 = vld [vmem:[%s0 + $0x60] sm:$0xff]
  %v34 = vld [vmem:[%s0 + $0x68] sm:$0xff]
  %v35 = vld [vmem:[%s0 + $0x70] sm:$0xff]
  %v36 = vld [vmem:[%s0 + $0x78] sm:$0xff]
  %v37 = vpack.c.bf16 %v22, %v21
  %v38 = vpack.c.bf16 %v24, %v23
  %v39 = vpack.c.bf16 %v26, %v25
  %v40 = vpack.c.bf16 %v28, %v27
  %v41 = vpack.c.bf16 %v30, %v29
  %v42 = vpack.c.bf16 %v32, %v31
  %v43 = vpack.c.bf16 %v34, %v33
  %v44 = vpack.c.bf16 %v36, %v35
  %v45 = vld [vmem:[%s1] sm:$0xf]
  %v46 = vld [vmem:[%s1 + $0x4] sm:$0xf]
  %v47 = vld [vmem:[%s1 + $0x8] sm:$0xf]
  %v48 = vld [vmem:[%s1 + $0xc] sm:$0xf]
  %v49 = vld [vmem:[%s2] sm:$0x1]
  %v51 = vlaneseq
  %v52 = vshrl.u32 %v51, 7
  %v53 = vsub.s32 0, %v52
  %v54 = vrot.slane %v49, %v53
  %v60 = vunpack.c.l.b16 %v45
  %v61 = vunpack.c.l.b16 %v46
  %v62 = vunpack.c.l.b16 %v47
  %v63 = vunpack.c.l.b16 %v48
  %v64 = vpack.c.b16 %v61, %v60
  %v65 = vpack.c.b16 %v63, %v62
  %vm68 = vcmask 261120
  %v70 = vsel %vm68, %v37, 0
  %v73 = vsel %vm68, %v38, 0
  %v76 = vsel %vm68, %v39, 0
  %v79 = vsel %vm68, %v40, 0
  %v82 = vsel %vm68, %v41, 0
  %v85 = vsel %vm68, %v42, 0
  %v88 = vsel %vm68, %v43, 0
  %v91 = vsel %vm68, %v44, 0
  %93 = vmatprep.subr.bf16.mxu0 0
  %94 = vmatpush1.bf16.msra.mxu0 0
  %95 = vmatprep.subr.bf16.mxu0 0
  %96 = vmatpush1.bf16.msra.mxu0 0
  %97 = vmatprep.subr.bf16.mxu0 0
  %98 = vmatpush1.bf16.msra.mxu0 0
  %99 = vmatprep.subr.bf16.mxu0 0
  %100 = vmatpush1.bf16.msra.mxu0 0
  %101 = vmatprep.subr.bf16.mxu0 0
  %102 = vmatpush1.bf16.msra.mxu0 0
  %103 = vmatprep.subr.bf16.mxu0 0
  %104 = vmatpush1.bf16.msra.mxu0 0
  %105 = vmatprep.subr.bf16.mxu0 0
  %106 = vmatpush1.bf16.msra.mxu0 %v65
  %107 = vmatprep.subr.bf16.mxu0 0
  %108 = vmatpush1.bf16.msra.mxu0 %v64
  %109 = vmatprep.subr.bf16.mxu0 0
  %110 = vmatpush2.bf16.msra.mxu0 0
  %111 = vmatprep.subr.bf16.mxu0 0
  %112 = vmatpush2.bf16.msra.mxu0 0
  %113 = vmatprep.subr.bf16.mxu0 0
  %114 = vmatpush2.bf16.msra.mxu0 0
  %115 = vmatprep.subr.bf16.mxu0 0
  %116 = vmatpush2.bf16.msra.mxu0 0
  %117 = vmatprep.subr.bf16.mxu0 0
  %118 = vmatpush2.bf16.msra.mxu0 0
  %119 = vmatprep.subr.bf16.mxu0 0
  %120 = vmatpush2.bf16.msra.mxu0 0
  %121 = vmatprep.subr.bf16.mxu0 0
  %122 = vmatpush2.bf16.msra.mxu0 0
  %123 = vmatprep.subr.bf16.mxu0 0
  %124 = vmatpush2.bf16.msra.mxu0 0
  %125 = vmatprep.mubr.bf16.mxu0 0
  %126 = vmatmul.mubr.bf16.gmra.mxu0 %v70
  %v127 = vpop.f32.mrf.mxu0
  %v128 = vadd.f32 %v54, %v127
  %v129 = vpop.f32.mrf.mxu0
  %v130 = vpop.f32.mrf.mxu0
  %v131 = vadd.f32 %v54, %v130
  %v132 = vpop.f32.mrf.mxu0
  %133 = vmatprep.mubr.bf16.mxu0 0
  %134 = vmatmul.mubr.bf16.gmra.mxu0 %v73
  %v135 = vpop.f32.mrf.mxu0
  %v136 = vadd.f32 %v54, %v135
  %v137 = vpop.f32.mrf.mxu0
  %v138 = vpop.f32.mrf.mxu0
  %v139 = vadd.f32 %v54, %v138
  %v140 = vpop.f32.mrf.mxu0
  %141 = vmatprep.mubr.bf16.mxu0 0
  %142 = vmatmul.mubr.bf16.gmra.mxu0 %v76
  %v143 = vpop.f32.mrf.mxu0
  %v144 = vadd.f32 %v54, %v143
  %v145 = vpop.f32.mrf.mxu0
  %v146 = vpop.f32.mrf.mxu0
  %v147 = vadd.f32 %v54, %v146
  %v148 = vpop.f32.mrf.mxu0
  %149 = vmatprep.mubr.bf16.mxu0 0
  %150 = vmatmul.mubr.bf16.gmra.mxu0 %v79
  %v151 = vpop.f32.mrf.mxu0
  %v152 = vadd.f32 %v54, %v151
  %v153 = vpop.f32.mrf.mxu0
  %v154 = vpop.f32.mrf.mxu0
  %v155 = vadd.f32 %v54, %v154
  %v156 = vpop.f32.mrf.mxu0
  %157 = vmatprep.mubr.bf16.mxu0 0
  %158 = vmatmul.mubr.bf16.gmra.mxu0 %v82
  %v159 = vpop.f32.mrf.mxu0
  %v160 = vadd.f32 %v54, %v159
  %v161 = vpop.f32.mrf.mxu0
  %v162 = vpop.f32.mrf.mxu0
  %v163 = vadd.f32 %v54, %v162
  %v164 = vpop.f32.mrf.mxu0
  %165 = vmatprep.mubr.bf16.mxu0 0
  %166 = vmatmul.mubr.bf16.gmra.mxu0 %v85
  %v167 = vpop.f32.mrf.mxu0
  %v168 = vadd.f32 %v54, %v167
  %v169 = vpop.f32.mrf.mxu0
  %v170 = vpop.f32.mrf.mxu0
  %v171 = vadd.f32 %v54, %v170
  %v172 = vpop.f32.mrf.mxu0
  %173 = vmatprep.mubr.bf16.mxu0 0
  %174 = vmatmul.mubr.bf16.gmra.mxu0 %v88
  %v175 = vpop.f32.mrf.mxu0
  %v176 = vadd.f32 %v54, %v175
  %v177 = vpop.f32.mrf.mxu0
  %v178 = vpop.f32.mrf.mxu0
  %v179 = vadd.f32 %v54, %v178
  %v180 = vpop.f32.mrf.mxu0
  %181 = vmatprep.mubr.bf16.mxu0 0
  %182 = vmatmul.mubr.bf16.gmra.mxu0 %v91
  %v183 = vpop.f32.mrf.mxu0
  %v184 = vadd.f32 %v54, %v183
  %v185 = vpop.f32.mrf.mxu0
  %v186 = vpop.f32.mrf.mxu0
  %v187 = vadd.f32 %v54, %v186
  %v188 = vpop.f32.mrf.mxu0
  %189 = vdwg.mxu0
  %v190 = vpack.c.bf16 %v131, %v128
  %v191 = vpack.c.bf16 %v139, %v136
  %v192 = vpack.c.bf16 %v147, %v144
  %v193 = vpack.c.bf16 %v155, %v152
  %v194 = vpack.c.bf16 %v163, %v160
  %v195 = vpack.c.bf16 %v171, %v168
  %v196 = vpack.c.bf16 %v179, %v176
  %v197 = vpack.c.bf16 %v187, %v184
  %202 = vrot.lane.b32.xlu0 %v190, 96
  %v203 = vpop.permute.xlu0 %202
  %204 = vrot.lane.b32.xlu0 %v191, 96
  %v205 = vpop.permute.xlu0 %204
  %206 = vrot.lane.b32.xlu0 %v192, 96
  %v207 = vpop.permute.xlu0 %206
  %208 = vrot.lane.b32.xlu0 %v193, 96
  %v209 = vpop.permute.xlu0 %208
  %vm210 = vcmask 130048
  %v212 = vsel %vm210, %v190, 0
  %v215 = vsel %vm210, %v191, 0
  %v218 = vsel %vm210, %v192, 0
  %v221 = vsel %vm210, %v193, 0
  %v224 = vsel %vm210, %v203, 0
  %v227 = vsel %vm210, %v205, 0
  %v230 = vsel %vm210, %v207, 0
  %v233 = vsel %vm210, %v209, 0
  %235 = vmatprep.subr.bf16.mxu0 0
  %236 = vmatpush1.bf16.xpose.msra.mxu0 0
  %237 = vmatprep.subr.bf16.mxu0 0
  %238 = vmatpush1.bf16.xpose.msra.mxu0 0
  %239 = vmatprep.subr.bf16.mxu0 0
  %240 = vmatpush1.bf16.xpose.msra.mxu0 0
  %241 = vmatprep.subr.bf16.mxu0 0
  %242 = vmatpush1.bf16.xpose.msra.mxu0 0
  %243 = vmatprep.subr.bf16.mxu0 0
  %244 = vmatpush1.bf16.xpose.msra.mxu0 %v233
  %245 = vmatprep.subr.bf16.mxu0 0
  %246 = vmatpush1.bf16.xpose.msra.mxu0 %v230
  %247 = vmatprep.subr.bf16.mxu0 0
  %248 = vmatpush1.bf16.xpose.msra.mxu0 %v227
  %249 = vmatprep.subr.bf16.mxu0 0
  %250 = vmatpush1.bf16.xpose.msra.mxu0 %v224
  %251 = vmatprep.subr.bf16.mxu0 0
  %252 = vmatpush2.bf16.xpose.msra.mxu0 0
  %253 = vmatprep.subr.bf16.mxu0 0
  %254 = vmatpush2.bf16.xpose.msra.mxu0 0
  %255 = vmatprep.subr.bf16.mxu0 0
  %256 = vmatpush2.bf16.xpose.msra.mxu0 0
  %257 = vmatprep.subr.bf16.mxu0 0
  %258 = vmatpush2.bf16.xpose.msra.mxu0 0
  %259 = vmatprep.subr.bf16.mxu0 0
  %260 = vmatpush2.bf16.xpose.msra.mxu0 0
  %261 = vmatprep.subr.bf16.mxu0 0
  %262 = vmatpush2.bf16.xpose.msra.mxu0 0
  %263 = vmatprep.subr.bf16.mxu0 0
  %264 = vmatpush2.bf16.xpose.msra.mxu0 0
  %265 = vmatprep.subr.bf16.mxu0 0
  %266 = vmatpush2.bf16.xpose.msra.mxu0 0
  %267 = vmatprep.mubr.bf16.mxu0 0
  %268 = vmatmul.mubr.bf16.gmra.mxu0 %v212
  %v269 = vpop.f32.mrf.mxu0
  %v270 = vadd.f32 0.0, %v269
  %v271 = vpop.f32.mrf.mxu0
  %v272 = vpop.f32.mrf.mxu0
  %v273 = vadd.f32 0.0, %v272
  %v274 = vpop.f32.mrf.mxu0
  %275 = vmatprep.mubr.bf16.mxu0 0
  %276 = vmatmul.mubr.bf16.gmra.mxu0 %v215
  %v277 = vpop.f32.mrf.mxu0
  %v278 = vadd.f32 0.0, %v277
  %v279 = vpop.f32.mrf.mxu0
  %v280 = vpop.f32.mrf.mxu0
  %v281 = vadd.f32 0.0, %v280
  %v282 = vpop.f32.mrf.mxu0
  %283 = vmatprep.mubr.bf16.mxu0 0
  %284 = vmatmul.mubr.bf16.gmra.mxu0 %v218
  %v285 = vpop.f32.mrf.mxu0
  %v286 = vadd.f32 0.0, %v285
  %v287 = vpop.f32.mrf.mxu0
  %v288 = vpop.f32.mrf.mxu0
  %v289 = vadd.f32 0.0, %v288
  %v290 = vpop.f32.mrf.mxu0
  %291 = vmatprep.mubr.bf16.mxu0 0
  %292 = vmatmul.mubr.bf16.gmra.mxu0 %v221
  %v293 = vpop.f32.mrf.mxu0
  %v294 = vadd.f32 0.0, %v293
  %v295 = vpop.f32.mrf.mxu0
  %v296 = vpop.f32.mrf.mxu0
  %v297 = vadd.f32 0.0, %v296
  %v298 = vpop.f32.mrf.mxu0
  %299 = vdwg.mxu0
  %304 = vrot.lane.b32.xlu0 %v194, 96
  %v305 = vpop.permute.xlu0 %304
  %306 = vrot.lane.b32.xlu0 %v195, 96
  %v307 = vpop.permute.xlu0 %306
  %308 = vrot.lane.b32.xlu0 %v196, 96
  %v309 = vpop.permute.xlu0 %308
  %310 = vrot.lane.b32.xlu0 %v197, 96
  %v311 = vpop.permute.xlu0 %310
  %v313 = vsel %vm210, %v194, 0
  %v316 = vsel %vm210, %v195, 0
  %v319 = vsel %vm210, %v196, 0
  %v322 = vsel %vm210, %v197, 0
  %v325 = vsel %vm210, %v305, 0
  %v328 = vsel %vm210, %v307, 0
  %v331 = vsel %vm210, %v309, 0
  %v334 = vsel %vm210, %v311, 0
  %336 = vmatprep.subr.bf16.mxu0 0
  %337 = vmatpush1.bf16.xpose.msra.mxu0 0
  %338 = vmatprep.subr.bf16.mxu0 0
  %339 = vmatpush1.bf16.xpose.msra.mxu0 0
  %340 = vmatprep.subr.bf16.mxu0 0
  %341 = vmatpush1.bf16.xpose.msra.mxu0 0
  %342 = vmatprep.subr.bf16.mxu0 0
  %343 = vmatpush1.bf16.xpose.msra.mxu0 0
  %344 = vmatprep.subr.bf16.mxu0 0
  %345 = vmatpush1.bf16.xpose.msra.mxu0 %v334
  %346 = vmatprep.subr.bf16.mxu0 0
  %347 = vmatpush1.bf16.xpose.msra.mxu0 %v331
  %348 = vmatprep.subr.bf16.mxu0 0
  %349 = vmatpush1.bf16.xpose.msra.mxu0 %v328
  %350 = vmatprep.subr.bf16.mxu0 0
  %351 = vmatpush1.bf16.xpose.msra.mxu0 %v325
  %352 = vmatprep.subr.bf16.mxu0 0
  %353 = vmatpush2.bf16.xpose.msra.mxu0 0
  %354 = vmatprep.subr.bf16.mxu0 0
  %355 = vmatpush2.bf16.xpose.msra.mxu0 0
  %356 = vmatprep.subr.bf16.mxu0 0
  %357 = vmatpush2.bf16.xpose.msra.mxu0 0
  %358 = vmatprep.subr.bf16.mxu0 0
  %359 = vmatpush2.bf16.xpose.msra.mxu0 0
  %360 = vmatprep.subr.bf16.mxu0 0
  %361 = vmatpush2.bf16.xpose.msra.mxu0 0
  %362 = vmatprep.subr.bf16.mxu0 0
  %363 = vmatpush2.bf16.xpose.msra.mxu0 0
  %364 = vmatprep.subr.bf16.mxu0 0
  %365 = vmatpush2.bf16.xpose.msra.mxu0 0
  %366 = vmatprep.subr.bf16.mxu0 0
  %367 = vmatpush2.bf16.xpose.msra.mxu0 0
  %368 = vmatprep.mubr.bf16.mxu0 0
  %369 = vmatmul.mubr.bf16.gmra.mxu0 %v313
  %v370 = vpop.f32.mrf.mxu0
  %v371 = vadd.f32 0.0, %v370
  %v372 = vpop.f32.mrf.mxu0
  %v373 = vpop.f32.mrf.mxu0
  %v374 = vadd.f32 0.0, %v373
  %v375 = vpop.f32.mrf.mxu0
  %376 = vmatprep.mubr.bf16.mxu0 0
  %377 = vmatmul.mubr.bf16.gmra.mxu0 %v316
  %v378 = vpop.f32.mrf.mxu0
  %v379 = vadd.f32 0.0, %v378
  %v380 = vpop.f32.mrf.mxu0
  %v381 = vpop.f32.mrf.mxu0
  %v382 = vadd.f32 0.0, %v381
  %v383 = vpop.f32.mrf.mxu0
  %384 = vmatprep.mubr.bf16.mxu0 0
  %385 = vmatmul.mubr.bf16.gmra.mxu0 %v319
  %v386 = vpop.f32.mrf.mxu0
  %v387 = vadd.f32 0.0, %v386
  %v388 = vpop.f32.mrf.mxu0
  %v389 = vpop.f32.mrf.mxu0
  %v390 = vadd.f32 0.0, %v389
  %v391 = vpop.f32.mrf.mxu0
  %392 = vmatprep.mubr.bf16.mxu0 0
  %393 = vmatmul.mubr.bf16.gmra.mxu0 %v322
  %v394 = vpop.f32.mrf.mxu0
  %v395 = vadd.f32 0.0, %v394
  %v396 = vpop.f32.mrf.mxu0
  %v397 = vpop.f32.mrf.mxu0
  %v398 = vadd.f32 0.0, %v397
  %v399 = vpop.f32.mrf.mxu0
  %400 = vdwg.mxu0
  %vm401 = vcmask 523264
  %v402 = vsel %vm401, %v270, -inf
  %403 = vmax.xlane.f32.xlu0 %v402
  %v404 = vpop.xlane.xlu0 %403
  %v405 = vsel %vm401, %v273, -inf
  %406 = vmax.xlane.f32.xlu0 %v405
  %v407 = vpop.xlane.xlu0 %406
  %v408 = vsel %vm401, %v278, -inf
  %409 = vmax.xlane.f32.xlu0 %v408
  %v410 = vpop.xlane.xlu0 %409
  %v411 = vsel %vm401, %v281, -inf
  %412 = vmax.xlane.f32.xlu0 %v411
  %v413 = vpop.xlane.xlu0 %412
  %v414 = vsel %vm401, %v286, -inf
  %415 = vmax.xlane.f32.xlu0 %v414
  %v416 = vpop.xlane.xlu0 %415
  %v417 = vsel %vm401, %v289, -inf
  %418 = vmax.xlane.f32.xlu0 %v417
  %v419 = vpop.xlane.xlu0 %418
  %v420 = vsel %vm401, %v294, -inf
  %421 = vmax.xlane.f32.xlu0 %v420
  %v422 = vpop.xlane.xlu0 %421
  %v423 = vsel %vm401, %v297, -inf
  %424 = vmax.xlane.f32.xlu0 %v423
  %v425 = vpop.xlane.xlu0 %424
  %v426 = vsel %vm401, %v371, -inf
  %427 = vmax.xlane.f32.xlu0 %v426
  %v428 = vpop.xlane.xlu0 %427
  %v429 = vsel %vm401, %v374, -inf
  %430 = vmax.xlane.f32.xlu0 %v429
  %v431 = vpop.xlane.xlu0 %430
  %v432 = vsel %vm401, %v379, -inf
  %433 = vmax.xlane.f32.xlu0 %v432
  %v434 = vpop.xlane.xlu0 %433
  %v435 = vsel %vm401, %v382, -inf
  %436 = vmax.xlane.f32.xlu0 %v435
  %v437 = vpop.xlane.xlu0 %436
  %v438 = vsel %vm401, %v387, -inf
  %439 = vmax.xlane.f32.xlu0 %v438
  %v440 = vpop.xlane.xlu0 %439
  %v441 = vsel %vm401, %v390, -inf
  %442 = vmax.xlane.f32.xlu0 %v441
  %v443 = vpop.xlane.xlu0 %442
  %v444 = vsel %vm401, %v395, -inf
  %445 = vmax.xlane.f32.xlu0 %v444
  %v446 = vpop.xlane.xlu0 %445
  %v447 = vsel %vm401, %v398, -inf
  %448 = vmax.xlane.f32.xlu0 %v447
  %v449 = vpop.xlane.xlu0 %448
  %v450 = vsub.f32 %v270, %v404
  %v451 = vsub.f32 %v273, %v407
  %v452 = vsub.f32 %v278, %v410
  %v453 = vsub.f32 %v281, %v413
  %v454 = vsub.f32 %v286, %v416
  %v455 = vsub.f32 %v289, %v419
  %v456 = vsub.f32 %v294, %v422
  %v457 = vsub.f32 %v297, %v425
  %v458 = vsub.f32 %v371, %v428
  %v459 = vsub.f32 %v374, %v431
  %v460 = vsub.f32 %v379, %v434
  %v461 = vsub.f32 %v382, %v437
  %v462 = vsub.f32 %v387, %v440
  %v463 = vsub.f32 %v390, %v443
  %v464 = vsub.f32 %v395, %v446
  %v465 = vsub.f32 %v398, %v449
  %v466 = vmul.f32 %v450, 1.442695
  %v467 = vpow.pop %v466
  %v468 = vmul.f32 %v451, 1.442695
  %v469 = vpow.pop %v468
  %v470 = vmul.f32 %v452, 1.442695
  %v471 = vpow.pop %v470
  %v472 = vmul.f32 %v453, 1.442695
  %v473 = vpow.pop %v472
  %v474 = vmul.f32 %v454, 1.442695
  %v475 = vpow.pop %v474
  %v476 = vmul.f32 %v455, 1.442695
  %v477 = vpow.pop %v476
  %v478 = vmul.f32 %v456, 1.442695
  %v479 = vpow.pop %v478
  %v480 = vmul.f32 %v457, 1.442695
  %v481 = vpow.pop %v480
  %v482 = vmul.f32 %v458, 1.442695
  %v483 = vpow.pop %v482
  %v484 = vmul.f32 %v459, 1.442695
  %v485 = vpow.pop %v484
  %v486 = vmul.f32 %v460, 1.442695
  %v487 = vpow.pop %v486
  %v488 = vmul.f32 %v461, 1.442695
  %v489 = vpow.pop %v488
  %v490 = vmul.f32 %v462, 1.442695
  %v491 = vpow.pop %v490
  %v492 = vmul.f32 %v463, 1.442695
  %v493 = vpow.pop %v492
  %v494 = vmul.f32 %v464, 1.442695
  %v495 = vpow.pop %v494
  %v496 = vmul.f32 %v465, 1.442695
  %v497 = vpow.pop %v496
  %v498 = vsel %vm401, %v467, 0.0
  %499 = vadd.xlane.f32.xlu0 %v498
  %v500 = vpop.xlane.xlu0 %499
  %v501 = vsel %vm401, %v469, 0.0
  %502 = vadd.xlane.f32.xlu0 %v501
  %v503 = vpop.xlane.xlu0 %502
  %v504 = vsel %vm401, %v471, 0.0
  %505 = vadd.xlane.f32.xlu0 %v504
  %v506 = vpop.xlane.xlu0 %505
  %v507 = vsel %vm401, %v473, 0.0
  %508 = vadd.xlane.f32.xlu0 %v507
  %v509 = vpop.xlane.xlu0 %508
  %v510 = vsel %vm401, %v475, 0.0
  %511 = vadd.xlane.f32.xlu0 %v510
  %v512 = vpop.xlane.xlu0 %511
  %v513 = vsel %vm401, %v477, 0.0
  %514 = vadd.xlane.f32.xlu0 %v513
  %v515 = vpop.xlane.xlu0 %514
  %v516 = vsel %vm401, %v479, 0.0
  %517 = vadd.xlane.f32.xlu0 %v516
  %v518 = vpop.xlane.xlu0 %517
  %v519 = vsel %vm401, %v481, 0.0
  %520 = vadd.xlane.f32.xlu0 %v519
  %v521 = vpop.xlane.xlu0 %520
  %v522 = vsel %vm401, %v483, 0.0
  %523 = vadd.xlane.f32.xlu0 %v522
  %v524 = vpop.xlane.xlu0 %523
  %v525 = vsel %vm401, %v485, 0.0
  %526 = vadd.xlane.f32.xlu0 %v525
  %v527 = vpop.xlane.xlu0 %526
  %v528 = vsel %vm401, %v487, 0.0
  %529 = vadd.xlane.f32.xlu0 %v528
  %v530 = vpop.xlane.xlu0 %529
  %v531 = vsel %vm401, %v489, 0.0
  %532 = vadd.xlane.f32.xlu0 %v531
  %v533 = vpop.xlane.xlu0 %532
  %v534 = vsel %vm401, %v491, 0.0
  %535 = vadd.xlane.f32.xlu0 %v534
  %v536 = vpop.xlane.xlu0 %535
  %v537 = vsel %vm401, %v493, 0.0
  %538 = vadd.xlane.f32.xlu0 %v537
  %v539 = vpop.xlane.xlu0 %538
  %v540 = vsel %vm401, %v495, 0.0
  %541 = vadd.xlane.f32.xlu0 %v540
  %v542 = vpop.xlane.xlu0 %541
  %v543 = vsel %vm401, %v497, 0.0
  %544 = vadd.xlane.f32.xlu0 %v543
  %v545 = vpop.xlane.xlu0 %544
  %v546 = vrcp.pop %v500
  %v547 = vrcp.pop %v503
  %v548 = vrcp.pop %v506
  %v549 = vrcp.pop %v509
  %v550 = vrcp.pop %v512
  %v551 = vrcp.pop %v515
  %v552 = vrcp.pop %v518
  %v553 = vrcp.pop %v521
  %v554 = vrcp.pop %v524
  %v555 = vrcp.pop %v527
  %v556 = vrcp.pop %v530
  %v557 = vrcp.pop %v533
  %v558 = vrcp.pop %v536
  %v559 = vrcp.pop %v539
  %v560 = vrcp.pop %v542
  %v561 = vrcp.pop %v545
  %v562 = vmul.f32 %v467, %v546
  %v563 = vmul.f32 %v469, %v547
  %v564 = vmul.f32 %v471, %v548
  %v565 = vmul.f32 %v473, %v549
  %v566 = vmul.f32 %v475, %v550
  %v567 = vmul.f32 %v477, %v551
  %v568 = vmul.f32 %v479, %v552
  %v569 = vmul.f32 %v481, %v553
  %v570 = vmul.f32 %v483, %v554
  %v571 = vmul.f32 %v485, %v555
  %v572 = vmul.f32 %v487, %v556
  %v573 = vmul.f32 %v489, %v557
  %v574 = vmul.f32 %v491, %v558
  %v575 = vmul.f32 %v493, %v559
  %v576 = vmul.f32 %v495, %v560
  %v577 = vmul.f32 %v497, %v561
  %v578 = vpack.c.bf16 %v563, %v562
  %v579 = vpack.c.bf16 %v565, %v564
  %v580 = vpack.c.bf16 %v567, %v566
  %v581 = vpack.c.bf16 %v569, %v568
  %v582 = vpack.c.bf16 %v571, %v570
  %v583 = vpack.c.bf16 %v573, %v572
  %v584 = vpack.c.bf16 %v575, %v574
  %v585 = vpack.c.bf16 %v577, %v576
  %586 = vrot.lane.b32.xlu0 %v190, 64
  %v587 = vpop.permute.xlu0 %586
  %588 = vrot.lane.b32.xlu0 %v191, 64
  %v589 = vpop.permute.xlu0 %588
  %590 = vrot.lane.b32.xlu0 %v192, 64
  %v591 = vpop.permute.xlu0 %590
  %592 = vrot.lane.b32.xlu0 %v193, 64
  %v593 = vpop.permute.xlu0 %592
  %v599 = vsel %vm401, %v578, 0
  %v602 = vsel %vm401, %v579, 0
  %v605 = vsel %vm401, %v580, 0
  %v608 = vsel %vm401, %v581, 0
  %610 = vmatprep.subr.bf16.mxu0 0
  %611 = vmatpush1.bf16.msra.mxu0 0
  %612 = vmatprep.subr.bf16.mxu0 0
  %613 = vmatpush1.bf16.msra.mxu0 0
  %614 = vmatprep.subr.bf16.mxu0 0
  %615 = vmatpush1.bf16.msra.mxu0 0
  %616 = vmatprep.subr.bf16.mxu0 0
  %617 = vmatpush1.bf16.msra.mxu0 0
  %618 = vmatprep.subr.bf16.mxu0 0
  %619 = vmatpush1.bf16.msra.mxu0 %v593
  %620 = vmatprep.subr.bf16.mxu0 0
  %621 = vmatpush1.bf16.msra.mxu0 %v591
  %622 = vmatprep.subr.bf16.mxu0 0
  %623 = vmatpush1.bf16.msra.mxu0 %v589
  %624 = vmatprep.subr.bf16.mxu0 0
  %625 = vmatpush1.bf16.msra.mxu0 %v587
  %626 = vmatprep.subr.bf16.mxu0 0
  %627 = vmatpush2.bf16.msra.mxu0 0
  %628 = vmatprep.subr.bf16.mxu0 0
  %629 = vmatpush2.bf16.msra.mxu0 0
  %630 = vmatprep.subr.bf16.mxu0 0
  %631 = vmatpush2.bf16.msra.mxu0 0
  %632 = vmatprep.subr.bf16.mxu0 0
  %633 = vmatpush2.bf16.msra.mxu0 0
  %634 = vmatprep.subr.bf16.mxu0 0
  %635 = vmatpush2.bf16.msra.mxu0 0
  %636 = vmatprep.subr.bf16.mxu0 0
  %637 = vmatpush2.bf16.msra.mxu0 0
  %638 = vmatprep.subr.bf16.mxu0 0
  %639 = vmatpush2.bf16.msra.mxu0 0
  %640 = vmatprep.subr.bf16.mxu0 0
  %641 = vmatpush2.bf16.msra.mxu0 0
  %642 = vmatprep.mubr.bf16.mxu0 0
  %643 = vmatmul.mubr.bf16.gmra.mxu0 %v599
  %v644 = vpop.f32.mrf.mxu0
  %v645 = vadd.f32 0.0, %v644
  %v646 = vpop.f32.mrf.mxu0
  %v647 = vpop.f32.mrf.mxu0
  %v648 = vadd.f32 0.0, %v647
  %v649 = vpop.f32.mrf.mxu0
  %650 = vmatprep.mubr.bf16.mxu0 0
  %651 = vmatmul.mubr.bf16.gmra.mxu0 %v602
  %v652 = vpop.f32.mrf.mxu0
  %v653 = vadd.f32 0.0, %v652
  %v654 = vpop.f32.mrf.mxu0
  %v655 = vpop.f32.mrf.mxu0
  %v656 = vadd.f32 0.0, %v655
  %v657 = vpop.f32.mrf.mxu0
  %658 = vmatprep.mubr.bf16.mxu0 0
  %659 = vmatmul.mubr.bf16.gmra.mxu0 %v605
  %v660 = vpop.f32.mrf.mxu0
  %v661 = vadd.f32 0.0, %v660
  %v662 = vpop.f32.mrf.mxu0
  %v663 = vpop.f32.mrf.mxu0
  %v664 = vadd.f32 0.0, %v663
  %v665 = vpop.f32.mrf.mxu0
  %666 = vmatprep.mubr.bf16.mxu0 0
  %667 = vmatmul.mubr.bf16.gmra.mxu0 %v608
  %v668 = vpop.f32.mrf.mxu0
  %v669 = vadd.f32 0.0, %v668
  %v670 = vpop.f32.mrf.mxu0
  %v671 = vpop.f32.mrf.mxu0
  %v672 = vadd.f32 0.0, %v671
  %v673 = vpop.f32.mrf.mxu0
  %674 = vdwg.mxu0
  %675 = vrot.lane.b32.xlu0 %v194, 64
  %v676 = vpop.permute.xlu0 %675
  %677 = vrot.lane.b32.xlu0 %v195, 64
  %v678 = vpop.permute.xlu0 %677
  %679 = vrot.lane.b32.xlu0 %v196, 64
  %v680 = vpop.permute.xlu0 %679
  %681 = vrot.lane.b32.xlu0 %v197, 64
  %v682 = vpop.permute.xlu0 %681
  %v688 = vsel %vm401, %v582, 0
  %v691 = vsel %vm401, %v583, 0
  %v694 = vsel %vm401, %v584, 0
  %v697 = vsel %vm401, %v585, 0
  %699 = vmatprep.subr.bf16.mxu0 0
  %700 = vmatpush1.bf16.msra.mxu0 0
  %701 = vmatprep.subr.bf16.mxu0 0
  %702 = vmatpush1.bf16.msra.mxu0 0
  %703 = vmatprep.subr.bf16.mxu0 0
  %704 = vmatpush1.bf16.msra.mxu0 0
  %705 = vmatprep.subr.bf16.mxu0 0
  %706 = vmatpush1.bf16.msra.mxu0 0
  %707 = vmatprep.subr.bf16.mxu0 0
  %708 = vmatpush1.bf16.msra.mxu0 %v682
  %709 = vmatprep.subr.bf16.mxu0 0
  %710 = vmatpush1.bf16.msra.mxu0 %v680
  %711 = vmatprep.subr.bf16.mxu0 0
  %712 = vmatpush1.bf16.msra.mxu0 %v678
  %713 = vmatprep.subr.bf16.mxu0 0
  %714 = vmatpush1.bf16.msra.mxu0 %v676
  %715 = vmatprep.subr.bf16.mxu0 0
  %716 = vmatpush2.bf16.msra.mxu0 0
  %717 = vmatprep.subr.bf16.mxu0 0
  %718 = vmatpush2.bf16.msra.mxu0 0
  %719 = vmatprep.subr.bf16.mxu0 0
  %720 = vmatpush2.bf16.msra.mxu0 0
  %721 = vmatprep.subr.bf16.mxu0 0
  %722 = vmatpush2.bf16.msra.mxu0 0
  %723 = vmatprep.subr.bf16.mxu0 0
  %724 = vmatpush2.bf16.msra.mxu0 0
  %725 = vmatprep.subr.bf16.mxu0 0
  %726 = vmatpush2.bf16.msra.mxu0 0
  %727 = vmatprep.subr.bf16.mxu0 0
  %728 = vmatpush2.bf16.msra.mxu0 0
  %729 = vmatprep.subr.bf16.mxu0 0
  %730 = vmatpush2.bf16.msra.mxu0 0
  %731 = vmatprep.mubr.bf16.mxu0 0
  %732 = vmatmul.mubr.bf16.gmra.mxu0 %v688
  %v733 = vpop.f32.mrf.mxu0
  %v734 = vadd.f32 0.0, %v733
  %v735 = vpop.f32.mrf.mxu0
  %v736 = vpop.f32.mrf.mxu0
  %v737 = vadd.f32 0.0, %v736
  %v738 = vpop.f32.mrf.mxu0
  %739 = vmatprep.mubr.bf16.mxu0 0
  %740 = vmatmul.mubr.bf16.gmra.mxu0 %v691
  %v741 = vpop.f32.mrf.mxu0
  %v742 = vadd.f32 0.0, %v741
  %v743 = vpop.f32.mrf.mxu0
  %v744 = vpop.f32.mrf.mxu0
  %v745 = vadd.f32 0.0, %v744
  %v746 = vpop.f32.mrf.mxu0
  %747 = vmatprep.mubr.bf16.mxu0 0
  %748 = vmatmul.mubr.bf16.gmra.mxu0 %v694
  %v749 = vpop.f32.mrf.mxu0
  %v750 = vadd.f32 0.0, %v749
  %v751 = vpop.f32.mrf.mxu0
  %v752 = vpop.f32.mrf.mxu0
  %v753 = vadd.f32 0.0, %v752
  %v754 = vpop.f32.mrf.mxu0
  %755 = vmatprep.mubr.bf16.mxu0 0
  %756 = vmatmul.mubr.bf16.gmra.mxu0 %v697
  %v757 = vpop.f32.mrf.mxu0
  %v758 = vadd.f32 0.0, %v757
  %v759 = vpop.f32.mrf.mxu0
  %v760 = vpop.f32.mrf.mxu0
  %v761 = vadd.f32 0.0, %v760
  %v762 = vpop.f32.mrf.mxu0
  %763 = vdwg.mxu0
  %v764 = vpack.c.bf16 %v648, %v645
  %v765 = vpack.c.bf16 %v656, %v653
  %v766 = vpack.c.bf16 %v664, %v661
  %v767 = vpack.c.bf16 %v672, %v669
  %v768 = vpack.c.bf16 %v737, %v734
  %v769 = vpack.c.bf16 %v745, %v742
  %v770 = vpack.c.bf16 %v753, %v750
  %v771 = vpack.c.bf16 %v761, %v758
  %v780 = vunpack.c.l.b16 %v764
  %v781 = vunpack.c.h.b16 %v764
  %v782 = vunpack.c.l.b16 %v765
  %v783 = vunpack.c.h.b16 %v765
  %v784 = vunpack.c.l.b16 %v766
  %v785 = vunpack.c.h.b16 %v766
  %v786 = vunpack.c.l.b16 %v767
  %v787 = vunpack.c.h.b16 %v767
  %v788 = vunpack.c.l.b16 %v768
  %v789 = vunpack.c.h.b16 %v768
  %v790 = vunpack.c.l.b16 %v769
  %v791 = vunpack.c.h.b16 %v769
  %v792 = vunpack.c.l.b16 %v770
  %v793 = vunpack.c.h.b16 %v770
  %v794 = vunpack.c.l.b16 %v771
  %v795 = vunpack.c.h.b16 %v771
  %v796 = vpack.c.b16 %v780, %v780
  %v797 = vpack.c.b16 %v781, %v781
  %v798 = vpack.c.b16 %v782, %v782
  %v799 = vpack.c.b16 %v783, %v783
  %v800 = vpack.c.b16 %v784, %v784
  %v801 = vpack.c.b16 %v785, %v785
  %v802 = vpack.c.b16 %v786, %v786
  %v803 = vpack.c.b16 %v787, %v787
  %v804 = vpack.c.b16 %v788, %v788
  %v805 = vpack.c.b16 %v789, %v789
  %v806 = vpack.c.b16 %v790, %v790
  %v807 = vpack.c.b16 %v791, %v791
  %v808 = vpack.c.b16 %v792, %v792
  %v809 = vpack.c.b16 %v793, %v793
  %v810 = vpack.c.b16 %v794, %v794
  %v811 = vpack.c.b16 %v795, %v795
  %vm828 = vcmask 125952
  %829 = vst.msk [vmem:[#allocation2] sm:$0xf] %vm828, %v796
  %830 = vst.msk [vmem:[#allocation2 + $0x4] sm:$0xf] %vm828, %v797
  %831 = vst.msk [vmem:[#allocation2 + $0x8] sm:$0xf] %vm828, %v798
  %832 = vst.msk [vmem:[#allocation2 + $0xc] sm:$0xf] %vm828, %v799
  %833 = vst.msk [vmem:[#allocation2 + $0x10] sm:$0xf] %vm828, %v800
  %834 = vst.msk [vmem:[#allocation2 + $0x14] sm:$0xf] %vm828, %v801
  %835 = vst.msk [vmem:[#allocation2 + $0x18] sm:$0xf] %vm828, %v802
  %836 = vst.msk [vmem:[#allocation2 + $0x1c] sm:$0xf] %vm828, %v803
  %837 = vst.msk [vmem:[#allocation2 + $0x20] sm:$0xf] %vm828, %v804
  %838 = vst.msk [vmem:[#allocation2 + $0x24] sm:$0xf] %vm828, %v805
  %839 = vst.msk [vmem:[#allocation2 + $0x28] sm:$0xf] %vm828, %v806
  %840 = vst.msk [vmem:[#allocation2 + $0x2c] sm:$0xf] %vm828, %v807
  %841 = vst.msk [vmem:[#allocation2 + $0x30] sm:$0xf] %vm828, %v808
  %842 = vst.msk [vmem:[#allocation2 + $0x34] sm:$0xf] %vm828, %v809
  %843 = vst.msk [vmem:[#allocation2 + $0x38] sm:$0xf] %vm828, %v810
  %844 = vst.msk [vmem:[#allocation2 + $0x3c] sm:$0xf] %vm828, %v811
  %845 = vrot.lane.b32.xlu0 %v190, 112
  %v846 = vpop.permute.xlu0 %845
  %847 = vrot.lane.b32.xlu0 %v191, 112
  %v848 = vpop.permute.xlu0 %847
  %849 = vrot.lane.b32.xlu0 %v192, 112
  %v850 = vpop.permute.xlu0 %849
  %851 = vrot.lane.b32.xlu0 %v193, 112
  %v852 = vpop.permute.xlu0 %851
  %853 = vrot.lane.b32.xlu0 %v190, 80
  %v854 = vpop.permute.xlu0 %853
  %855 = vrot.lane.b32.xlu0 %v191, 80
  %v856 = vpop.permute.xlu0 %855
  %857 = vrot.lane.b32.xlu0 %v192, 80
  %v858 = vpop.permute.xlu0 %857
  %859 = vrot.lane.b32.xlu0 %v193, 80
  %v860 = vpop.permute.xlu0 %859
  %v862 = vsel %vm210, %v846, 0
  %v865 = vsel %vm210, %v848, 0
  %v868 = vsel %vm210, %v850, 0
  %v871 = vsel %vm210, %v852, 0
  %v874 = vsel %vm210, %v854, 0
  %v877 = vsel %vm210, %v856, 0
  %v880 = vsel %vm210, %v858, 0
  %v883 = vsel %vm210, %v860, 0
  %885 = vmatprep.subr.bf16.mxu0 0
  %886 = vmatpush1.bf16.xpose.msra.mxu0 0
  %887 = vmatprep.subr.bf16.mxu0 0
  %888 = vmatpush1.bf16.xpose.msra.mxu0 0
  %889 = vmatprep.subr.bf16.mxu0 0
  %890 = vmatpush1.bf16.xpose.msra.mxu0 0
  %891 = vmatprep.subr.bf16.mxu0 0
  %892 = vmatpush1.bf16.xpose.msra.mxu0 0
  %893 = vmatprep.subr.bf16.mxu0 0
  %894 = vmatpush1.bf16.xpose.msra.mxu0 %v883
  %895 = vmatprep.subr.bf16.mxu0 0
  %896 = vmatpush1.bf16.xpose.msra.mxu0 %v880
  %897 = vmatprep.subr.bf16.mxu0 0
  %898 = vmatpush1.bf16.xpose.msra.mxu0 %v877
  %899 = vmatprep.subr.bf16.mxu0 0
  %900 = vmatpush1.bf16.xpose.msra.mxu0 %v874
  %901 = vmatprep.subr.bf16.mxu0 0
  %902 = vmatpush2.bf16.xpose.msra.mxu0 0
  %903 = vmatprep.subr.bf16.mxu0 0
  %904 = vmatpush2.bf16.xpose.msra.mxu0 0
  %905 = vmatprep.subr.bf16.mxu0 0
  %906 = vmatpush2.bf16.xpose.msra.mxu0 0
  %907 = vmatprep.subr.bf16.mxu0 0
  %908 = vmatpush2.bf16.xpose.msra.mxu0 0
  %909 = vmatprep.subr.bf16.mxu0 0
  %910 = vmatpush2.bf16.xpose.msra.mxu0 0
  %911 = vmatprep.subr.bf16.mxu0 0
  %912 = vmatpush2.bf16.xpose.msra.mxu0 0
  %913 = vmatprep.subr.bf16.mxu0 0
  %914 = vmatpush2.bf16.xpose.msra.mxu0 0
  %915 = vmatprep.subr.bf16.mxu0 0
  %916 = vmatpush2.bf16.xpose.msra.mxu0 0
  %917 = vmatprep.mubr.bf16.mxu0 0
  %918 = vmatmul.mubr.bf16.gmra.mxu0 %v862
  %v919 = vpop.f32.mrf.mxu0
  %v920 = vadd.f32 0.0, %v919
  %v921 = vpop.f32.mrf.mxu0
  %v922 = vpop.f32.mrf.mxu0
  %v923 = vadd.f32 0.0, %v922
  %v924 = vpop.f32.mrf.mxu0
  %925 = vmatprep.mubr.bf16.mxu0 0
  %926 = vmatmul.mubr.bf16.gmra.mxu0 %v865
  %v927 = vpop.f32.mrf.mxu0
  %v928 = vadd.f32 0.0, %v927
  %v929 = vpop.f32.mrf.mxu0
  %v930 = vpop.f32.mrf.mxu0
  %v931 = vadd.f32 0.0, %v930
  %v932 = vpop.f32.mrf.mxu0
  %933 = vmatprep.mubr.bf16.mxu0 0
  %934 = vmatmul.mubr.bf16.gmra.mxu0 %v868
  %v935 = vpop.f32.mrf.mxu0
  %v936 = vadd.f32 0.0, %v935
  %v937 = vpop.f32.mrf.mxu0
  %v938 = vpop.f32.mrf.mxu0
  %v939 = vadd.f32 0.0, %v938
  %v940 = vpop.f32.mrf.mxu0
  %941 = vmatprep.mubr.bf16.mxu0 0
  %942 = vmatmul.mubr.bf16.gmra.mxu0 %v871
  %v943 = vpop.f32.mrf.mxu0
  %v944 = vadd.f32 0.0, %v943
  %v945 = vpop.f32.mrf.mxu0
  %v946 = vpop.f32.mrf.mxu0
  %v947 = vadd.f32 0.0, %v946
  %v948 = vpop.f32.mrf.mxu0
  %949 = vdwg.mxu0
  %950 = vrot.lane.b32.xlu0 %v194, 112
  %v951 = vpop.permute.xlu0 %950
  %952 = vrot.lane.b32.xlu0 %v195, 112
  %v953 = vpop.permute.xlu0 %952
  %954 = vrot.lane.b32.xlu0 %v196, 112
  %v955 = vpop.permute.xlu0 %954
  %956 = vrot.lane.b32.xlu0 %v197, 112
  %v957 = vpop.permute.xlu0 %956
  %958 = vrot.lane.b32.xlu0 %v194, 80
  %v959 = vpop.permute.xlu0 %958
  %960 = vrot.lane.b32.xlu0 %v195, 80
  %v961 = vpop.permute.xlu0 %960
  %962 = vrot.lane.b32.xlu0 %v196, 80
  %v963 = vpop.permute.xlu0 %962
  %964 = vrot.lane.b32.xlu0 %v197, 80
  %v965 = vpop.permute.xlu0 %964
  %v967 = vsel %vm210, %v951, 0
  %v970 = vsel %vm210, %v953, 0
  %v973 = vsel %vm210, %v955, 0
  %v976 = vsel %vm210, %v957, 0
  %v979 = vsel %vm210, %v959, 0
  %v982 = vsel %vm210, %v961, 0
  %v985 = vsel %vm210, %v963, 0
  %v988 = vsel %vm210, %v965, 0
  %990 = vmatprep.subr.bf16.mxu0 0
  %991 = vmatpush1.bf16.xpose.msra.mxu0 0
  %992 = vmatprep.subr.bf16.mxu0 0
  %993 = vmatpush1.bf16.xpose.msra.mxu0 0
  %994 = vmatprep.subr.bf16.mxu0 0
  %995 = vmatpush1.bf16.xpose.msra.mxu0 0
  %996 = vmatprep.subr.bf16.mxu0 0
  %997 = vmatpush1.bf16.xpose.msra.mxu0 0
  %998 = vmatprep.subr.bf16.mxu0 0
  %999 = vmatpush1.bf16.xpose.msra.mxu0 %v988
  %1000 = vmatprep.subr.bf16.mxu0 0
  %1001 = vmatpush1.bf16.xpose.msra.mxu0 %v985
  %1002 = vmatprep.subr.bf16.mxu0 0
  %1003 = vmatpush1.bf16.xpose.msra.mxu0 %v982
  %1004 = vmatprep.subr.bf16.mxu0 0
  %1005 = vmatpush1.bf16.xpose.msra.mxu0 %v979
  %1006 = vmatprep.subr.bf16.mxu0 0
  %1007 = vmatpush2.bf16.xpose.msra.mxu0 0
  %1008 = vmatprep.subr.bf16.mxu0 0
  %1009 = vmatpush2.bf16.xpose.msra.mxu0 0
  %1010 = vmatprep.subr.bf16.mxu0 0
  %1011 = vmatpush2.bf16.xpose.msra.mxu0 0
  %1012 = vmatprep.subr.bf16.mxu0 0
  %1013 = vmatpush2.bf16.xpose.msra.mxu0 0
  %1014 = vmatprep.subr.bf16.mxu0 0
  %1015 = vmatpush2.bf16.xpose.msra.mxu0 0
  %1016 = vmatprep.subr.bf16.mxu0 0
  %1017 = vmatpush2.bf16.xpose.msra.mxu0 0
  %1018 = vmatprep.subr.bf16.mxu0 0
  %1019 = vmatpush2.bf16.xpose.msra.mxu0 0
  %1020 = vmatprep.subr.bf16.mxu0 0
  %1021 = vmatpush2.bf16.xpose.msra.mxu0 0
  %1022 = vmatprep.mubr.bf16.mxu0 0
  %1023 = vmatmul.mubr.bf16.gmra.mxu0 %v967
  %v1024 = vpop.f32.mrf.mxu0
  %v1025 = vadd.f32 0.0, %v1024
  %v1026 = vpop.f32.mrf.mxu0
  %v1027 = vpop.f32.mrf.mxu0
  %v1028 = vadd.f32 0.0, %v1027
  %v1029 = vpop.f32.mrf.mxu0
  %1030 = vmatprep.mubr.bf16.mxu0 0
  %1031 = vmatmul.mubr.bf16.gmra.mxu0 %v970
  %v1032 = vpop.f32.mrf.mxu0
  %v1033 = vadd.f32 0.0, %v1032
  %v1034 = vpop.f32.mrf.mxu0
  %v1035 = vpop.f32.mrf.mxu0
  %v1036 = vadd.f32 0.0, %v1035
  %v1037 = vpop.f32.mrf.mxu0
  %1038 = vmatprep.mubr.bf16.mxu0 0
  %1039 = vmatmul.mubr.bf16.gmra.mxu0 %v973
  %v1040 = vpop.f32.mrf.mxu0
  %v1041 = vadd.f32 0.0, %v1040
  %v1042 = vpop.f32.mrf.mxu0
  %v1043 = vpop.f32.mrf.mxu0
  %v1044 = vadd.f32 0.0, %v1043
  %v1045 = vpop.f32.mrf.mxu0
  %1046 = vmatprep.mubr.bf16.mxu0 0
  %1047 = vmatmul.mubr.bf16.gmra.mxu0 %v976
  %v1048 = vpop.f32.mrf.mxu0
  %v1049 = vadd.f32 0.0, %v1048
  %v1050 = vpop.f32.mrf.mxu0
  %v1051 = vpop.f32.mrf.mxu0
  %v1052 = vadd.f32 0.0, %v1051
  %v1053 = vpop.f32.mrf.mxu0
  %1054 = vdwg.mxu0
  %v1055 = vsel %vm401, %v920, -inf
  %1056 = vmax.xlane.f32.xlu0 %v1055
  %v1057 = vpop.xlane.xlu0 %1056
  %v1058 = vsel %vm401, %v923, -inf
  %1059 = vmax.xlane.f32.xlu0 %v1058
  %v1060 = vpop.xlane.xlu0 %1059
  %v1061 = vsel %vm401, %v928, -inf
  %1062 = vmax.xlane.f32.xlu0 %v1061
  %v1063 = vpop.xlane.xlu0 %1062
  %v1064 = vsel %vm401, %v931, -inf
  %1065 = vmax.xlane.f32.xlu0 %v1064
  %v1066 = vpop.xlane.xlu0 %1065
  %v1067 = vsel %vm401, %v936, -inf
  %1068 = vmax.xlane.f32.xlu0 %v1067
  %v1069 = vpop.xlane.xlu0 %1068
  %v1070 = vsel %vm401, %v939, -inf
  %1071 = vmax.xlane.f32.xlu0 %v1070
  %v1072 = vpop.xlane.xlu0 %1071
  %v1073 = vsel %vm401, %v944, -inf
  %1074 = vmax.xlane.f32.xlu0 %v1073
  %v1075 = vpop.xlane.xlu0 %1074
  %v1076 = vsel %vm401, %v947, -inf
  %1077 = vmax.xlane.f32.xlu0 %v1076
  %v1078 = vpop.xlane.xlu0 %1077
  %v1079 = vsel %vm401, %v1025, -inf
  %1080 = vmax.xlane.f32.xlu0 %v1079
  %v1081 = vpop.xlane.xlu0 %1080
  %v1082 = vsel %vm401, %v1028, -inf
  %1083 = vmax.xlane.f32.xlu0 %v1082
  %v1084 = vpop.xlane.xlu0 %1083
  %v1085 = vsel %vm401, %v1033, -inf
  %1086 = vmax.xlane.f32.xlu0 %v1085
  %v1087 = vpop.xlane.xlu0 %1086
  %v1088 = vsel %vm401, %v1036, -inf
  %1089 = vmax.xlane.f32.xlu0 %v1088
  %v1090 = vpop.xlane.xlu0 %1089
  %v1091 = vsel %vm401, %v1041, -inf
  %1092 = vmax.xlane.f32.xlu0 %v1091
  %v1093 = vpop.xlane.xlu0 %1092
  %v1094 = vsel %vm401, %v1044, -inf
  %1095 = vmax.xlane.f32.xlu0 %v1094
  %v1096 = vpop.xlane.xlu0 %1095
  %v1097 = vsel %vm401, %v1049, -inf
  %1098 = vmax.xlane.f32.xlu0 %v1097
  %v1099 = vpop.xlane.xlu0 %1098
  %v1100 = vsel %vm401, %v1052, -inf
  %1101 = vmax.xlane.f32.xlu0 %v1100
  %v1102 = vpop.xlane.xlu0 %1101
  %v1103 = vsub.f32 %v920, %v1057
  %v1104 = vsub.f32 %v923, %v1060
  %v1105 = vsub.f32 %v928, %v1063
  %v1106 = vsub.f32 %v931, %v1066
  %v1107 = vsub.f32 %v936, %v1069
  %v1108 = vsub.f32 %v939, %v1072
  %v1109 = vsub.f32 %v944, %v1075
  %v1110 = vsub.f32 %v947, %v1078
  %v1111 = vsub.f32 %v1025, %v1081
  %v1112 = vsub.f32 %v1028, %v1084
  %v1113 = vsub.f32 %v1033, %v1087
  %v1114 = vsub.f32 %v1036, %v1090
  %v1115 = vsub.f32 %v1041, %v1093
  %v1116 = vsub.f32 %v1044, %v1096
  %v1117 = vsub.f32 %v1049, %v1099
  %v1118 = vsub.f32 %v1052, %v1102
  %v1119 = vmul.f32 %v1103, 1.442695
  %v1120 = vpow.pop %v1119
  %v1121 = vmul.f32 %v1104, 1.442695
  %v1122 = vpow.pop %v1121
  %v1123 = vmul.f32 %v1105, 1.442695
  %v1124 = vpow.pop %v1123
  %v1125 = vmul.f32 %v1106, 1.442695
  %v1126 = vpow.pop %v1125
  %v1127 = vmul.f32 %v1107, 1.442695
  %v1128 = vpow.pop %v1127
  %v1129 = vmul.f32 %v1108, 1.442695
  %v1130 = vpow.pop %v1129
  %v1131 = vmul.f32 %v1109, 1.442695
  %v1132 = vpow.pop %v1131
  %v1133 = vmul.f32 %v1110, 1.442695
  %v1134 = vpow.pop %v1133
  %v1135 = vmul.f32 %v1111, 1.442695
  %v1136 = vpow.pop %v1135
  %v1137 = vmul.f32 %v1112, 1.442695
  %v1138 = vpow.pop %v1137
  %v1139 = vmul.f32 %v1113, 1.442695
  %v1140 = vpow.pop %v1139
  %v1141 = vmul.f32 %v1114, 1.442695
  %v1142 = vpow.pop %v1141
  %v1143 = vmul.f32 %v1115, 1.442695
  %v1144 = vpow.pop %v1143
  %v1145 = vmul.f32 %v1116, 1.442695
  %v1146 = vpow.pop %v1145
  %v1147 = vmul.f32 %v1117, 1.442695
  %v1148 = vpow.pop %v1147
  %v1149 = vmul.f32 %v1118, 1.442695
  %v1150 = vpow.pop %v1149
  %v1151 = vsel %vm401, %v1120, 0.0
  %1152 = vadd.xlane.f32.xlu0 %v1151
  %v1153 = vpop.xlane.xlu0 %1152
  %v1154 = vsel %vm401, %v1122, 0.0
  %1155 = vadd.xlane.f32.xlu0 %v1154
  %v1156 = vpop.xlane.xlu0 %1155
  %v1157 = vsel %vm401, %v1124, 0.0
  %1158 = vadd.xlane.f32.xlu0 %v1157
  %v1159 = vpop.xlane.xlu0 %1158
  %v1160 = vsel %vm401, %v1126, 0.0
  %1161 = vadd.xlane.f32.xlu0 %v1160
  %v1162 = vpop.xlane.xlu0 %1161
  %v1163 = vsel %vm401, %v1128, 0.0
  %1164 = vadd.xlane.f32.xlu0 %v1163
  %v1165 = vpop.xlane.xlu0 %1164
  %v1166 = vsel %vm401, %v1130, 0.0
  %1167 = vadd.xlane.f32.xlu0 %v1166
  %v1168 = vpop.xlane.xlu0 %1167
  %v1169 = vsel %vm401, %v1132, 0.0
  %1170 = vadd.xlane.f32.xlu0 %v1169
  %v1171 = vpop.xlane.xlu0 %1170
  %v1172 = vsel %vm401, %v1134, 0.0
  %1173 = vadd.xlane.f32.xlu0 %v1172
  %v1174 = vpop.xlane.xlu0 %1173
  %v1175 = vsel %vm401, %v1136, 0.0
  %1176 = vadd.xlane.f32.xlu0 %v1175
  %v1177 = vpop.xlane.xlu0 %1176
  %v1178 = vsel %vm401, %v1138, 0.0
  %1179 = vadd.xlane.f32.xlu0 %v1178
  %v1180 = vpop.xlane.xlu0 %1179
  %v1181 = vsel %vm401, %v1140, 0.0
  %1182 = vadd.xlane.f32.xlu0 %v1181
  %v1183 = vpop.xlane.xlu0 %1182
  %v1184 = vsel %vm401, %v1142, 0.0
  %1185 = vadd.xlane.f32.xlu0 %v1184
  %v1186 = vpop.xlane.xlu0 %1185
  %v1187 = vsel %vm401, %v1144, 0.0
  %1188 = vadd.xlane.f32.xlu0 %v1187
  %v1189 = vpop.xlane.xlu0 %1188
  %v1190 = vsel %vm401, %v1146, 0.0
  %1191 = vadd.xlane.f32.xlu0 %v1190
  %v1192 = vpop.xlane.xlu0 %1191
  %v1193 = vsel %vm401, %v1148, 0.0
  %1194 = vadd.xlane.f32.xlu0 %v1193
  %v1195 = vpop.xlane.xlu0 %1194
  %v1196 = vsel %vm401, %v1150, 0.0
  %1197 = vadd.xlane.f32.xlu0 %v1196
  %v1198 = vpop.xlane.xlu0 %1197
  %v1199 = vrcp.pop %v1153
  %v1200 = vrcp.pop %v1156
  %v1201 = vrcp.pop %v1159
  %v1202 = vrcp.pop %v1162
  %v1203 = vrcp.pop %v1165
  %v1204 = vrcp.pop %v1168
  %v1205 = vrcp.pop %v1171
  %v1206 = vrcp.pop %v1174
  %v1207 = vrcp.pop %v1177
  %v1208 = vrcp.pop %v1180
  %v1209 = vrcp.pop %v1183
  %v1210 = vrcp.pop %v1186
  %v1211 = vrcp.pop %v1189
  %v1212 = vrcp.pop %v1192
  %v1213 = vrcp.pop %v1195
  %v1214 = vrcp.pop %v1198
  %v1215 = vmul.f32 %v1120, %v1199
  %v1216 = vmul.f32 %v1122, %v1200
  %v1217 = vmul.f32 %v1124, %v1201
  %v1218 = vmul.f32 %v1126, %v1202
  %v1219 = vmul.f32 %v1128, %v1203
  %v1220 = vmul.f32 %v1130, %v1204
  %v1221 = vmul.f32 %v1132, %v1205
  %v1222 = vmul.f32 %v1134, %v1206
  %v1223 = vmul.f32 %v1136, %v1207
  %v1224 = vmul.f32 %v1138, %v1208
  %v1225 = vmul.f32 %v1140, %v1209
  %v1226 = vmul.f32 %v1142, %v1210
  %v1227 = vmul.f32 %v1144, %v1211
  %v1228 = vmul.f32 %v1146, %v1212
  %v1229 = vmul.f32 %v1148, %v1213
  %v1230 = vmul.f32 %v1150, %v1214
  %v1231 = vpack.c.bf16 %v1216, %v1215
  %v1232 = vpack.c.bf16 %v1218, %v1217
  %v1233 = vpack.c.bf16 %v1220, %v1219
  %v1234 = vpack.c.bf16 %v1222, %v1221
  %v1235 = vpack.c.bf16 %v1224, %v1223
  %v1236 = vpack.c.bf16 %v1226, %v1225
  %v1237 = vpack.c.bf16 %v1228, %v1227
  %v1238 = vpack.c.bf16 %v1230, %v1229
  %1239 = vrot.lane.b32.xlu0 %v190, 48
  %v1240 = vpop.permute.xlu0 %1239
  %1241 = vrot.lane.b32.xlu0 %v191, 48
  %v1242 = vpop.permute.xlu0 %1241
  %1243 = vrot.lane.b32.xlu0 %v192, 48
  %v1244 = vpop.permute.xlu0 %1243
  %1245 = vrot.lane.b32.xlu0 %v193, 48
  %v1246 = vpop.permute.xlu0 %1245
  %v1252 = vsel %vm401, %v1231, 0
  %v1255 = vsel %vm401, %v1232, 0
  %v1258 = vsel %vm401, %v1233, 0
  %v1261 = vsel %vm401, %v1234, 0
  %1263 = vmatprep.subr.bf16.mxu0 0
  %1264 = vmatpush1.bf16.msra.mxu0 0
  %1265 = vmatprep.subr.bf16.mxu0 0
  %1266 = vmatpush1.bf16.msra.mxu0 0
  %1267 = vmatprep.subr.bf16.mxu0 0
  %1268 = vmatpush1.bf16.msra.mxu0 0
  %1269 = vmatprep.subr.bf16.mxu0 0
  %1270 = vmatpush1.bf16.msra.mxu0 0
  %1271 = vmatprep.subr.bf16.mxu0 0
  %1272 = vmatpush1.bf16.msra.mxu0 %v1246
  %1273 = vmatprep.subr.bf16.mxu0 0
  %1274 = vmatpush1.bf16.msra.mxu0 %v1244
  %1275 = vmatprep.subr.bf16.mxu0 0
  %1276 = vmatpush1.bf16.msra.mxu0 %v1242
  %1277 = vmatprep.subr.bf16.mxu0 0
  %1278 = vmatpush1.bf16.msra.mxu0 %v1240
  %1279 = vmatprep.subr.bf16.mxu0 0
  %1280 = vmatpush2.bf16.msra.mxu0 0
  %1281 = vmatprep.subr.bf16.mxu0 0
  %1282 = vmatpush2.bf16.msra.mxu0 0
  %1283 = vmatprep.subr.bf16.mxu0 0
  %1284 = vmatpush2.bf16.msra.mxu0 0
  %1285 = vmatprep.subr.bf16.mxu0 0
  %1286 = vmatpush2.bf16.msra.mxu0 0
  %1287 = vmatprep.subr.bf16.mxu0 0
  %1288 = vmatpush2.bf16.msra.mxu0 0
  %1289 = vmatprep.subr.bf16.mxu0 0
  %1290 = vmatpush2.bf16.msra.mxu0 0
  %1291 = vmatprep.subr.bf16.mxu0 0
  %1292 = vmatpush2.bf16.msra.mxu0 0
  %1293 = vmatprep.subr.bf16.mxu0 0
  %1294 = vmatpush2.bf16.msra.mxu0 0
  %1295 = vmatprep.mubr.bf16.mxu0 0
  %1296 = vmatmul.mubr.bf16.gmra.mxu0 %v1252
  %v1297 = vpop.f32.mrf.mxu0
  %v1298 = vadd.f32 0.0, %v1297
  %v1299 = vpop.f32.mrf.mxu0
  %v1300 = vpop.f32.mrf.mxu0
  %v1301 = vadd.f32 0.0, %v1300
  %v1302 = vpop.f32.mrf.mxu0
  %1303 = vmatprep.mubr.bf16.mxu0 0
  %1304 = vmatmul.mubr.bf16.gmra.mxu0 %v1255
  %v1305 = vpop.f32.mrf.mxu0
  %v1306 = vadd.f32 0.0, %v1305
  %v1307 = vpop.f32.mrf.mxu0
  %v1308 = vpop.f32.mrf.mxu0
  %v1309 = vadd.f32 0.0, %v1308
  %v1310 = vpop.f32.mrf.mxu0
  %1311 = vmatprep.mubr.bf16.mxu0 0
  %1312 = vmatmul.mubr.bf16.gmra.mxu0 %v1258
  %v1313 = vpop.f32.mrf.mxu0
  %v1314 = vadd.f32 0.0, %v1313
  %v1315 = vpop.f32.mrf.mxu0
  %v1316 = vpop.f32.mrf.mxu0
  %v1317 = vadd.f32 0.0, %v1316
  %v1318 = vpop.f32.mrf.mxu0
  %1319 = vmatprep.mubr.bf16.mxu0 0
  %1320 = vmatmul.mubr.bf16.gmra.mxu0 %v1261
  %v1321 = vpop.f32.mrf.mxu0
  %v1322 = vadd.f32 0.0, %v1321
  %v1323 = vpop.f32.mrf.mxu0
  %v1324 = vpop.f32.mrf.mxu0
  %v1325 = vadd.f32 0.0, %v1324
  %v1326 = vpop.f32.mrf.mxu0
  %1327 = vdwg.mxu0
  %1328 = vrot.lane.b32.xlu0 %v194, 48
  %v1329 = vpop.permute.xlu0 %1328
  %1330 = vrot.lane.b32.xlu0 %v195, 48
  %v1331 = vpop.permute.xlu0 %1330
  %1332 = vrot.lane.b32.xlu0 %v196, 48
  %v1333 = vpop.permute.xlu0 %1332
  %1334 = vrot.lane.b32.xlu0 %v197, 48
  %v1335 = vpop.permute.xlu0 %1334
  %v1341 = vsel %vm401, %v1235, 0
  %v1344 = vsel %vm401, %v1236, 0
  %v1347 = vsel %vm401, %v1237, 0
  %v1350 = vsel %vm401, %v1238, 0
  %1352 = vmatprep.subr.bf16.mxu0 0
  %1353 = vmatpush1.bf16.msra.mxu0 0
  %1354 = vmatprep.subr.bf16.mxu0 0
  %1355 = vmatpush1.bf16.msra.mxu0 0
  %1356 = vmatprep.subr.bf16.mxu0 0
  %1357 = vmatpush1.bf16.msra.mxu0 0
  %1358 = vmatprep.subr.bf16.mxu0 0
  %1359 = vmatpush1.bf16.msra.mxu0 0
  %1360 = vmatprep.subr.bf16.mxu0 0
  %1361 = vmatpush1.bf16.msra.mxu0 %v1335
  %1362 = vmatprep.subr.bf16.mxu0 0
  %1363 = vmatpush1.bf16.msra.mxu0 %v1333
  %1364 = vmatprep.subr.bf16.mxu0 0
  %1365 = vmatpush1.bf16.msra.mxu0 %v1331
  %1366 = vmatprep.subr.bf16.mxu0 0
  %1367 = vmatpush1.bf16.msra.mxu0 %v1329
  %1368 = vmatprep.subr.bf16.mxu0 0
  %1369 = vmatpush2.bf16.msra.mxu0 0
  %1370 = vmatprep.subr.bf16.mxu0 0
  %1371 = vmatpush2.bf16.msra.mxu0 0
  %1372 = vmatprep.subr.bf16.mxu0 0
  %1373 = vmatpush2.bf16.msra.mxu0 0
  %1374 = vmatprep.subr.bf16.mxu0 0
  %1375 = vmatpush2.bf16.msra.mxu0 0
  %1376 = vmatprep.subr.bf16.mxu0 0
  %1377 = vmatpush2.bf16.msra.mxu0 0
  %1378 = vmatprep.subr.bf16.mxu0 0
  %1379 = vmatpush2.bf16.msra.mxu0 0
  %1380 = vmatprep.subr.bf16.mxu0 0
  %1381 = vmatpush2.bf16.msra.mxu0 0
  %1382 = vmatprep.subr.bf16.mxu0 0
  %1383 = vmatpush2.bf16.msra.mxu0 0
  %1384 = vmatprep.mubr.bf16.mxu0 0
  %1385 = vmatmul.mubr.bf16.gmra.mxu0 %v1341
  %v1386 = vpop.f32.mrf.mxu0
  %v1387 = vadd.f32 0.0, %v1386
  %v1388 = vpop.f32.mrf.mxu0
  %v1389 = vpop.f32.mrf.mxu0
  %v1390 = vadd.f32 0.0, %v1389
  %v1391 = vpop.f32.mrf.mxu0
  %1392 = vmatprep.mubr.bf16.mxu0 0
  %1393 = vmatmul.mubr.bf16.gmra.mxu0 %v1344
  %v1394 = vpop.f32.mrf.mxu0
  %v1395 = vadd.f32 0.0, %v1394
  %v1396 = vpop.f32.mrf.mxu0
  %v1397 = vpop.f32.mrf.mxu0
  %v1398 = vadd.f32 0.0, %v1397
  %v1399 = vpop.f32.mrf.mxu0
  %1400 = vmatprep.mubr.bf16.mxu0 0
  %1401 = vmatmul.mubr.bf16.gmra.mxu0 %v1347
  %v1402 = vpop.f32.mrf.mxu0
  %v1403 = vadd.f32 0.0, %v1402
  %v1404 = vpop.f32.mrf.mxu0
  %v1405 = vpop.f32.mrf.mxu0
  %v1406 = vadd.f32 0.0, %v1405
  %v1407 = vpop.f32.mrf.mxu0
  %1408 = vmatprep.mubr.bf16.mxu0 0
  %1409 = vmatmul.mubr.bf16.gmra.mxu0 %v1350
  %v1410 = vpop.f32.mrf.mxu0
  %v1411 = vadd.f32 0.0, %v1410
  %v1412 = vpop.f32.mrf.mxu0
  %v1413 = vpop.f32.mrf.mxu0
  %v1414 = vadd.f32 0.0, %v1413
  %v1415 = vpop.f32.mrf.mxu0
  %1416 = vdwg.mxu0
  %v1417 = vpack.c.bf16 %v1301, %v1298
  %v1418 = vpack.c.bf16 %v1309, %v1306
  %v1419 = vpack.c.bf16 %v1317, %v1314
  %v1420 = vpack.c.bf16 %v1325, %v1322
  %v1421 = vpack.c.bf16 %v1390, %v1387
  %v1422 = vpack.c.bf16 %v1398, %v1395
  %v1423 = vpack.c.bf16 %v1406, %v1403
  %v1424 = vpack.c.bf16 %v1414, %v1411
  %v1433 = vunpack.c.l.b16 %v1417
  %v1434 = vunpack.c.h.b16 %v1417
  %v1435 = vunpack.c.l.b16 %v1418
  %v1436 = vunpack.c.h.b16 %v1418
  %v1437 = vunpack.c.l.b16 %v1419
  %v1438 = vunpack.c.h.b16 %v1419
  %v1439 = vunpack.c.l.b16 %v1420
  %v1440 = vunpack.c.h.b16 %v1420
  %v1441 = vunpack.c.l.b16 %v1421
  %v1442 = vunpack.c.h.b16 %v1421
  %v1443 = vunpack.c.l.b16 %v1422
  %v1444 = vunpack.c.h.b16 %v1422
  %v1445 = vunpack.c.l.b16 %v1423
  %v1446 = vunpack.c.h.b16 %v1423
  %v1447 = vunpack.c.l.b16 %v1424
  %v1448 = vunpack.c.h.b16 %v1424
  %v1449 = vpack.c.b16 %v1433, %v1433
  %v1450 = vpack.c.b16 %v1434, %v1434
  %v1451 = vpack.c.b16 %v1435, %v1435
  %v1452 = vpack.c.b16 %v1436, %v1436
  %v1453 = vpack.c.b16 %v1437, %v1437
  %v1454 = vpack.c.b16 %v1438, %v1438
  %v1455 = vpack.c.b16 %v1439, %v1439
  %v1456 = vpack.c.b16 %v1440, %v1440
  %v1457 = vpack.c.b16 %v1441, %v1441
  %v1458 = vpack.c.b16 %v1442, %v1442
  %v1459 = vpack.c.b16 %v1443, %v1443
  %v1460 = vpack.c.b16 %v1444, %v1444
  %v1461 = vpack.c.b16 %v1445, %v1445
  %v1462 = vpack.c.b16 %v1446, %v1446
  %v1463 = vpack.c.b16 %v1447, %v1447
  %v1464 = vpack.c.b16 %v1448, %v1448
  %1465 = vrot.lane.b32.xlu0 %v1449, 16
  %v1466 = vpop.permute.xlu0 %1465
  %1467 = vrot.lane.b32.xlu0 %v1450, 16
  %v1468 = vpop.permute.xlu0 %1467
  %1469 = vrot.lane.b32.xlu0 %v1451, 16
  %v1470 = vpop.permute.xlu0 %1469
  %1471 = vrot.lane.b32.xlu0 %v1452, 16
  %v1472 = vpop.permute.xlu0 %1471
  %1473 = vrot.lane.b32.xlu0 %v1453, 16
  %v1474 = vpop.permute.xlu0 %1473
  %1475 = vrot.lane.b32.xlu0 %v1454, 16
  %v1476 = vpop.permute.xlu0 %1475
  %1477 = vrot.lane.b32.xlu0 %v1455, 16
  %v1478 = vpop.permute.xlu0 %1477
  %1479 = vrot.lane.b32.xlu0 %v1456, 16
  %v1480 = vpop.permute.xlu0 %1479
  %1481 = vrot.lane.b32.xlu0 %v1457, 16
  %v1482 = vpop.permute.xlu0 %1481
  %1483 = vrot.lane.b32.xlu0 %v1458, 16
  %v1484 = vpop.permute.xlu0 %1483
  %1485 = vrot.lane.b32.xlu0 %v1459, 16
  %v1486 = vpop.permute.xlu0 %1485
  %1487 = vrot.lane.b32.xlu0 %v1460, 16
  %v1488 = vpop.permute.xlu0 %1487
  %1489 = vrot.lane.b32.xlu0 %v1461, 16
  %v1490 = vpop.permute.xlu0 %1489
  %1491 = vrot.lane.b32.xlu0 %v1462, 16
  %v1492 = vpop.permute.xlu0 %1491
  %1493 = vrot.lane.b32.xlu0 %v1463, 16
  %v1494 = vpop.permute.xlu0 %1493
  %1495 = vrot.lane.b32.xlu0 %v1464, 16
  %v1496 = vpop.permute.xlu0 %1495
  %vm1513 = vcmask 257152
  %1514 = vst.msk [vmem:[#allocation2] sm:$0xf] %vm1513, %v1466
  %1515 = vst.msk [vmem:[#allocation2 + $0x4] sm:$0xf] %vm1513, %v1468
  %1516 = vst.msk [vmem:[#allocation2 + $0x8] sm:$0xf] %vm1513, %v1470
  %1517 = vst.msk [vmem:[#allocation2 + $0xc] sm:$0xf] %vm1513, %v1472
  %1518 = vst.msk [vmem:[#allocation2 + $0x10] sm:$0xf] %vm1513, %v1474
  %1519 = vst.msk [vmem:[#allocation2 + $0x14] sm:$0xf] %vm1513, %v1476
  %1520 = vst.msk [vmem:[#allocation2 + $0x18] sm:$0xf] %vm1513, %v1478
  %1521 = vst.msk [vmem:[#allocation2 + $0x1c] sm:$0xf] %vm1513, %v1480
  %1522 = vst.msk [vmem:[#allocation2 + $0x20] sm:$0xf] %vm1513, %v1482
  %1523 = vst.msk [vmem:[#allocation2 + $0x24] sm:$0xf] %vm1513, %v1484
  %1524 = vst.msk [vmem:[#allocation2 + $0x28] sm:$0xf] %vm1513, %v1486
  %1525 = vst.msk [vmem:[#allocation2 + $0x2c] sm:$0xf] %vm1513, %v1488
  %1526 = vst.msk [vmem:[#allocation2 + $0x30] sm:$0xf] %vm1513, %v1490
  %1527 = vst.msk [vmem:[#allocation2 + $0x34] sm:$0xf] %vm1513, %v1492
  %1528 = vst.msk [vmem:[#allocation2 + $0x38] sm:$0xf] %vm1513, %v1494
  %1529 = vst.msk [vmem:[#allocation2 + $0x3c] sm:$0xf] %vm1513, %v1496
  %v1530 = vld [vmem:[#allocation2] sm:$0xf]
  %v1531 = vld [vmem:[#allocation2 + $0x4] sm:$0xf]
  %v1532 = vld [vmem:[#allocation2 + $0x8] sm:$0xf]
  %v1533 = vld [vmem:[#allocation2 + $0xc] sm:$0xf]
  %v1534 = vld [vmem:[#allocation2 + $0x10] sm:$0xf]
  %v1535 = vld [vmem:[#allocation2 + $0x14] sm:$0xf]
  %v1536 = vld [vmem:[#allocation2 + $0x18] sm:$0xf]
  %v1537 = vld [vmem:[#allocation2 + $0x1c] sm:$0xf]
  %v1538 = vld [vmem:[#allocation2 + $0x20] sm:$0xf]
  %v1539 = vld [vmem:[#allocation2 + $0x24] sm:$0xf]
  %v1540 = vld [vmem:[#allocation2 + $0x28] sm:$0xf]
  %v1541 = vld [vmem:[#allocation2 + $0x2c] sm:$0xf]
  %v1542 = vld [vmem:[#allocation2 + $0x30] sm:$0xf]
  %v1543 = vld [vmem:[#allocation2 + $0x34] sm:$0xf]
  %v1544 = vld [vmem:[#allocation2 + $0x38] sm:$0xf]
  %v1545 = vld [vmem:[#allocation2 + $0x3c] sm:$0xf]
  %v1546 = vld [vmem:[%s3] sm:$0xf]
  %v1547 = vld [vmem:[%s3 + $0x4] sm:$0xf]
  %v1548 = vld [vmem:[%s3 + $0x8] sm:$0xf]
  %v1549 = vld [vmem:[%s3 + $0xc] sm:$0xf]
  %v1566 = vunpack.c.l.b16 %v1530
  %v1567 = vunpack.c.l.b16 %v1531
  %v1568 = vunpack.c.l.b16 %v1532
  %v1569 = vunpack.c.l.b16 %v1533
  %v1570 = vunpack.c.l.b16 %v1534
  %v1571 = vunpack.c.l.b16 %v1535
  %v1572 = vunpack.c.l.b16 %v1536
  %v1573 = vunpack.c.l.b16 %v1537
  %v1574 = vunpack.c.l.b16 %v1538
  %v1575 = vunpack.c.l.b16 %v1539
  %v1576 = vunpack.c.l.b16 %v1540
  %v1577 = vunpack.c.l.b16 %v1541
  %v1578 = vunpack.c.l.b16 %v1542
  %v1579 = vunpack.c.l.b16 %v1543
  %v1580 = vunpack.c.l.b16 %v1544
  %v1581 = vunpack.c.l.b16 %v1545
  %v1582 = vpack.c.b16 %v1567, %v1566
  %v1583 = vpack.c.b16 %v1569, %v1568
  %v1584 = vpack.c.b16 %v1571, %v1570
  %v1585 = vpack.c.b16 %v1573, %v1572
  %v1586 = vpack.c.b16 %v1575, %v1574
  %v1587 = vpack.c.b16 %v1577, %v1576
  %v1588 = vpack.c.b16 %v1579, %v1578
  %v1589 = vpack.c.b16 %v1581, %v1580
  %v1594 = vunpack.c.l.b16 %v1546
  %v1595 = vunpack.c.l.b16 %v1547
  %v1596 = vunpack.c.l.b16 %v1548
  %v1597 = vunpack.c.l.b16 %v1549
  %v1598 = vpack.c.b16 %v1595, %v1594
  %v1599 = vpack.c.b16 %v1597, %v1596
  %v1603 = vsel %vm68, %v1582, 0
  %v1606 = vsel %vm68, %v1583, 0
  %v1609 = vsel %vm68, %v1584, 0
  %v1612 = vsel %vm68, %v1585, 0
  %v1615 = vsel %vm68, %v1586, 0
  %v1618 = vsel %vm68, %v1587, 0
  %v1621 = vsel %vm68, %v1588, 0
  %v1624 = vsel %vm68, %v1589, 0
  %1626 = vmatprep.subr.bf16.mxu0 0
  %1627 = vmatpush1.bf16.msra.mxu0 0
  %1628 = vmatprep.subr.bf16.mxu0 0
  %1629 = vmatpush1.bf16.msra.mxu0 0
  %1630 = vmatprep.subr.bf16.mxu0 0
  %1631 = vmatpush1.bf16.msra.mxu0 0
  %1632 = vmatprep.subr.bf16.mxu0 0
  %1633 = vmatpush1.bf16.msra.mxu0 0
  %1634 = vmatprep.subr.bf16.mxu0 0
  %1635 = vmatpush1.bf16.msra.mxu0 0
  %1636 = vmatprep.subr.bf16.mxu0 0
  %1637 = vmatpush1.bf16.msra.mxu0 0
  %1638 = vmatprep.subr.bf16.mxu0 0
  %1639 = vmatpush1.bf16.msra.mxu0 %v1599
  %1640 = vmatprep.subr.bf16.mxu0 0
  %1641 = vmatpush1.bf16.msra.mxu0 %v1598
  %1642 = vmatprep.subr.bf16.mxu0 0
  %1643 = vmatpush2.bf16.msra.mxu0 0
  %1644 = vmatprep.subr.bf16.mxu0 0
  %1645 = vmatpush2.bf16.msra.mxu0 0
  %1646 = vmatprep.subr.bf16.mxu0 0
  %1647 = vmatpush2.bf16.msra.mxu0 0
  %1648 = vmatprep.subr.bf16.mxu0 0
  %1649 = vmatpush2.bf16.msra.mxu0 0
  %1650 = vmatprep.subr.bf16.mxu0 0
  %1651 = vmatpush2.bf16.msra.mxu0 0
  %1652 = vmatprep.subr.bf16.mxu0 0
  %1653 = vmatpush2.bf16.msra.mxu0 0
  %1654 = vmatprep.subr.bf16.mxu0 0
  %1655 = vmatpush2.bf16.msra.mxu0 0
  %1656 = vmatprep.subr.bf16.mxu0 0
  %1657 = vmatpush2.bf16.msra.mxu0 0
  %1658 = vmatprep.mubr.bf16.mxu0 0
  %1659 = vmatmul.mubr.bf16.gmra.mxu0 %v1603
  %v1660 = vpop.f32.mrf.mxu0
  %v1661 = vadd.f32 0.0, %v1660
  %v1662 = vpop.f32.mrf.mxu0
  %v1663 = vpop.f32.mrf.mxu0
  %v1664 = vadd.f32 0.0, %v1663
  %v1665 = vpop.f32.mrf.mxu0
  %1666 = vmatprep.mubr.bf16.mxu0 0
  %1667 = vmatmul.mubr.bf16.gmra.mxu0 %v1606
  %v1668 = vpop.f32.mrf.mxu0
  %v1669 = vadd.f32 0.0, %v1668
  %v1670 = vpop.f32.mrf.mxu0
  %v1671 = vpop.f32.mrf.mxu0
  %v1672 = vadd.f32 0.0, %v1671
  %v1673 = vpop.f32.mrf.mxu0
  %1674 = vmatprep.mubr.bf16.mxu0 0
  %1675 = vmatmul.mubr.bf16.gmra.mxu0 %v1609
  %v1676 = vpop.f32.mrf.mxu0
  %v1677 = vadd.f32 0.0, %v1676
  %v1678 = vpop.f32.mrf.mxu0
  %v1679 = vpop.f32.mrf.mxu0
  %v1680 = vadd.f32 0.0, %v1679
  %v1681 = vpop.f32.mrf.mxu0
  %1682 = vmatprep.mubr.bf16.mxu0 0
  %1683 = vmatmul.mubr.bf16.gmra.mxu0 %v1612
  %v1684 = vpop.f32.mrf.mxu0
  %v1685 = vadd.f32 0.0, %v1684
  %v1686 = vpop.f32.mrf.mxu0
  %v1687 = vpop.f32.mrf.mxu0
  %v1688 = vadd.f32 0.0, %v1687
  %v1689 = vpop.f32.mrf.mxu0
  %1690 = vmatprep.mubr.bf16.mxu0 0
  %1691 = vmatmul.mubr.bf16.gmra.mxu0 %v1615
  %v1692 = vpop.f32.mrf.mxu0
  %v1693 = vadd.f32 0.0, %v1692
  %v1694 = vpop.f32.mrf.mxu0
  %v1695 = vpop.f32.mrf.mxu0
  %v1696 = vadd.f32 0.0, %v1695
  %v1697 = vpop.f32.mrf.mxu0
  %1698 = vmatprep.mubr.bf16.mxu0 0
  %1699 = vmatmul.mubr.bf16.gmra.mxu0 %v1618
  %v1700 = vpop.f32.mrf.mxu0
  %v1701 = vadd.f32 0.0, %v1700
  %v1702 = vpop.f32.mrf.mxu0
  %v1703 = vpop.f32.mrf.mxu0
  %v1704 = vadd.f32 0.0, %v1703
  %v1705 = vpop.f32.mrf.mxu0
  %1706 = vmatprep.mubr.bf16.mxu0 0
  %1707 = vmatmul.mubr.bf16.gmra.mxu0 %v1621
  %v1708 = vpop.f32.mrf.mxu0
  %v1709 = vadd.f32 0.0, %v1708
  %v1710 = vpop.f32.mrf.mxu0
  %v1711 = vpop.f32.mrf.mxu0
  %v1712 = vadd.f32 0.0, %v1711
  %v1713 = vpop.f32.mrf.mxu0
  %1714 = vmatprep.mubr.bf16.mxu0 0
  %1715 = vmatmul.mubr.bf16.gmra.mxu0 %v1624
  %v1716 = vpop.f32.mrf.mxu0
  %v1717 = vadd.f32 0.0, %v1716
  %v1718 = vpop.f32.mrf.mxu0
  %v1719 = vpop.f32.mrf.mxu0
  %v1720 = vadd.f32 0.0, %v1719
  %v1721 = vpop.f32.mrf.mxu0
  %1722 = vdwg.mxu0
  %v1723 = vadd.f32 %v21, %v1661
  %v1724 = vadd.f32 %v22, %v1664
  %v1725 = vadd.f32 %v23, %v1669
  %v1726 = vadd.f32 %v24, %v1672
  %v1727 = vadd.f32 %v25, %v1677
  %v1728 = vadd.f32 %v26, %v1680
  %v1729 = vadd.f32 %v27, %v1685
  %v1730 = vadd.f32 %v28, %v1688
  %v1731 = vadd.f32 %v29, %v1693
  %v1732 = vadd.f32 %v30, %v1696
  %v1733 = vadd.f32 %v31, %v1701
  %v1734 = vadd.f32 %v32, %v1704
  %v1735 = vadd.f32 %v33, %v1709
  %v1736 = vadd.f32 %v34, %v1712
  %v1737 = vadd.f32 %v35, %v1717
  %v1738 = vadd.f32 %v36, %v1720
  %v1739 = vld [vmem:[%s4] sm:$0x1]
  %v1741 = vlaneseq
  %v1742 = vshrl.u32 %v1741, 7
  %v1743 = vsub.s32 0, %v1742
  %v1744 = vrot.slane %v1739, %v1743
  %v1746 = vadd.f32 %v1723, %v1744
  %v1747 = vadd.f32 %v1724, %v1744
  %v1748 = vadd.f32 %v1725, %v1744
  %v1749 = vadd.f32 %v1726, %v1744
  %v1750 = vadd.f32 %v1727, %v1744
  %v1751 = vadd.f32 %v1728, %v1744
  %v1752 = vadd.f32 %v1729, %v1744
  %v1753 = vadd.f32 %v1730, %v1744
  %v1754 = vadd.f32 %v1731, %v1744
  %v1755 = vadd.f32 %v1732, %v1744
  %v1756 = vadd.f32 %v1733, %v1744
  %v1757 = vadd.f32 %v1734, %v1744
  %v1758 = vadd.f32 %v1735, %v1744
  %v1759 = vadd.f32 %v1736, %v1744
  %v1760 = vadd.f32 %v1737, %v1744
  %v1761 = vadd.f32 %v1738, %v1744
  %1762 = vst.msk [vmem:[%s5] sm:$0xff] %vm68, %v1746
  %1763 = vst.msk [vmem:[%s5 + $0x8] sm:$0xff] %vm68, %v1747
  %1764 = vst.msk [vmem:[%s5 + $0x10] sm:$0xff] %vm68, %v1748
  %1765 = vst.msk [vmem:[%s5 + $0x18] sm:$0xff] %vm68, %v1749
  %1766 = vst.msk [vmem:[%s5 + $0x20] sm:$0xff] %vm68, %v1750
  %1767 = vst.msk [vmem:[%s5 + $0x28] sm:$0xff] %vm68, %v1751
  %1768 = vst.msk [vmem:[%s5 + $0x30] sm:$0xff] %vm68, %v1752
  %1769 = vst.msk [vmem:[%s5 + $0x38] sm:$0xff] %vm68, %v1753
  %1770 = vst.msk [vmem:[%s5 + $0x40] sm:$0xff] %vm68, %v1754
  %1771 = vst.msk [vmem:[%s5 + $0x48] sm:$0xff] %vm68, %v1755
  %1772 = vst.msk [vmem:[%s5 + $0x50] sm:$0xff] %vm68, %v1756
  %1773 = vst.msk [vmem:[%s5 + $0x58] sm:$0xff] %vm68, %v1757
  %1774 = vst.msk [vmem:[%s5 + $0x60] sm:$0xff] %vm68, %v1758
  %1775 = vst.msk [vmem:[%s5 + $0x68] sm:$0xff] %vm68, %v1759
  %1776 = vst.msk [vmem:[%s5 + $0x70] sm:$0xff] %vm68, %v1760
  %1777 = vst.msk [vmem:[%s5 + $0x78] sm:$0xff] %vm68, %v1761
  // Predicated region
  $region22: #{tpu_custom_call.1} parent=0 // pred_check
    _
  $region23: #{tpu_custom_call.1} parent=0 // pred_check_branch
    %1779 = sbr.rel (0) target = $region25
  $region24: #{tpu_custom_call.1} parent=0 // pred_region
    _
  $region25: #{tpu_custom_call.1} parent=0 // pred_fallthru
    _
  // Predicated region
  $region26: #{tpu_custom_call.1} parent=0 // pred_check
    _
  $region27: #{tpu_custom_call.1} parent=0 // pred_check_branch
    %1781 = sbr.rel (0) target = $region29
  $region28: #{tpu_custom_call.1} parent=0 // pred_region
    _
  $region29: #{tpu_custom_call.1} parent=0 // pred_fallthru
    _

</llo_original>
